<compile_context>
chip_gen: v6e
topology: v6e:2x2x1
jax: 0.10.0
libtpu: 0.0.40
codegen_flags: <defaults>
</compile_context>

<pallas_src>
import functools

import jax
import jax.numpy as jnp
from jax.experimental import pallas as pl
from jax.experimental.pallas import tpu as pltpu


def _round_up(x, m):
    return (x + m - 1) // m * m


# ----------------------------------------------------------------------------
# Pallas GEMM kernel: o = act(A @ B + bias) [+ residual]
# ----------------------------------------------------------------------------
def _gemm_kernel(a_ref, b_ref, bias_ref, *rest, act, tk, has_res):
    if has_res:
        res_ref, o_ref, acc_ref = rest
    else:
        o_ref, acc_ref = rest

    k = pl.program_id(2)
    nk = pl.num_programs(2)

    @pl.when(k == 0)
    def _():
        acc_ref[...] = jnp.zeros_like(acc_ref)

    koff = pl.multiple_of(k * tk, tk)
    acc_ref[...] += jnp.dot(
        a_ref[...],
        b_ref[pl.ds(koff, tk), :],
        preferred_element_type=jnp.float32,
    )

    @pl.when(k == nk - 1)
    def _():
        out = acc_ref[...] + bias_ref[...]
        if act == "relu":
            out = jnp.maximum(out, 0.0)
        elif act == "sigmoid":
            # exp + approximate reciprocal both live on the EUP slot (free here);
            # clip keeps the result exactly inside [0, 1].
            out = jnp.clip(
                pl.reciprocal(1.0 + jnp.exp(-out), approx=True), 0.0, 1.0
            )
        if has_res:
            out = out + res_ref[...]          # fused skip-connection add
        o_ref[...] = out.astype(o_ref.dtype)


def gemm_bias_act(a, b, bias, act="none", residual=None):
    """a:(M,K) f32, b:(K,N) f32, bias:(N,), residual:(M,N) f32 or None."""
    M, K = a.shape
    K2, N = b.shape
    assert K == K2, (a.shape, b.shape)

    # --- pad to MXU/lane friendly sizes --------------------------------------
    Kp = _round_up(K, 128)
    tk = max(t for t in range(128, min(Kp, 512) + 1, 128) if Kp % t == 0)
    Np = _round_up(N, 128)
    tn = 128
    if M >= 256:
        tm = 256
        Mp = _round_up(M, tm)
    else:
        Mp = _round_up(M, 16)
        tm = Mp

    a_p = jnp.pad(a.astype(jnp.bfloat16), ((0, Mp - M), (0, Kp - K)))
    b_p = jnp.pad(b.astype(jnp.bfloat16), ((0, Kp - K), (0, Np - N)))
    bias_p = jnp.pad(bias.astype(jnp.float32).reshape(1, N), ((0, 0), (0, Np - N)))

    has_res = residual is not None
    inputs = [a_p, b_p, bias_p]
    in_specs = [
        pl.BlockSpec((tm, tk), lambda j, i, k: (i, k)),      # A: streamed
        pl.BlockSpec((Kp, tn), lambda j, i, k: (0, j)),      # B: resident over i,k
        pl.BlockSpec((1, tn), lambda j, i, k: (0, j)),       # bias: resident
    ]
    if has_res:
        r_p = jnp.pad(residual.astype(jnp.float32), ((0, Mp - M), (0, Np - N)))
        inputs.append(r_p)
        in_specs.append(pl.BlockSpec((tm, tn), lambda j, i, k: (i, j)))

    grid = (Np // tn, Mp // tm, Kp // tk)   # j outermost -> B/bias resident

    out = pl.pallas_call(
        functools.partial(_gemm_kernel, act=act, tk=tk, has_res=has_res),
        out_shape=jax.ShapeDtypeStruct((Mp, Np), jnp.float32),
        grid=grid,
        in_specs=in_specs,
        out_specs=pl.BlockSpec((tm, tn), lambda j, i, k: (i, j)),
        scratch_shapes=[pltpu.VMEM((tm, tn), jnp.float32)],
        compiler_params=pltpu.CompilerParams(
            dimension_semantics=("parallel", "parallel", "arbitrary"),
            vmem_limit_bytes=48 * 1024 * 1024,   # safe on v5e/v6e/v7x
        ),
    )(*inputs)
    return out[:M, :N]


# ----------------------------------------------------------------------------
# Element-wise mask multiply (mask_image), lane-dense tiled
# ----------------------------------------------------------------------------
def _mul_kernel(x_ref, m_ref, o_ref):
    o_ref[...] = x_ref[...] * m_ref[...]


def masked_mul(x, m):
    shape, dtype = x.shape, x.dtype
    n = x.size
    lane = 128
    rows = pl.cdiv(n, lane)
    br = 256 if rows >= 256 else _round_up(rows, 8)
    rows_p = _round_up(rows, br)
    total = rows_p * lane
    xf = jnp.pad(x.reshape(-1), (0, total - n)).reshape(rows_p, lane)
    mf = jnp.pad(m.reshape(-1), (0, total - n)).reshape(rows_p, lane)
    out = pl.pallas_call(
        _mul_kernel,
        out_shape=jax.ShapeDtypeStruct((rows_p, lane), dtype),
        grid=(rows_p // br,),
        in_specs=[pl.BlockSpec((br, lane), lambda i: (i, 0)),
                  pl.BlockSpec((br, lane), lambda i: (i, 0))],
        out_specs=pl.BlockSpec((br, lane), lambda i: (i, 0)),
        compiler_params=pltpu.CompilerParams(dimension_semantics=("parallel",)),
    )(xf, mf)
    return out.reshape(-1)[:n].reshape(shape)


# ----------------------------------------------------------------------------
# Conv2d lowering: im2col (plain-JAX glue) + Pallas GEMM
# ----------------------------------------------------------------------------
def _im2col(x, kh, kw, stride, pad):
    """x: NHWC -> (N*Ho*Wo, kh*kw*C), patch element order (kh, kw, c)."""
    N, H, W, C = x.shape
    xp = jnp.pad(x, ((0, 0), (pad, pad), (pad, pad), (0, 0)))
    Ho = (H + 2 * pad - kh) // stride + 1
    Wo = (W + 2 * pad - kw) // stride + 1
    cols = []
    for ki in range(kh):
        for kj in range(kw):
            cols.append(
                xp[:, ki: ki + stride * (Ho - 1) + 1: stride,
                      kj: kj + stride * (Wo - 1) + 1: stride, :]
            )
    patches = jnp.concatenate(cols, axis=-1)
    return patches.reshape(N * Ho * Wo, kh * kw * C), (N, Ho, Wo)


def conv2d(x, w, b, stride, padding, act):
    """x: NHWC, w: (O, I, kH, kW) (PyTorch Conv2d layout), b: (O,)."""
    O, I, kH, kW = w.shape
    a, (N, Ho, Wo) = _im2col(x, kH, kW, stride, padding)
    wmat = jnp.transpose(w, (2, 3, 1, 0)).reshape(kH * kW * I, O)
    out = gemm_bias_act(a, wmat, b, act)
    return out.reshape(N, Ho, Wo, O)


# ----------------------------------------------------------------------------
# ConvTranspose2d via sub-pixel phase decomposition (no zero-dilation)
# ----------------------------------------------------------------------------
def _shifted_slice(x, dy, dx, qh, qw):
    """x[:, q+dy, q'+dx, :] for q<qh, q'<qw; zero outside spatial bounds."""
    N, H, W, C = x.shape
    pt, pltop = max(0, -dy), max(0, -dx)
    pb = max(0, (qh - 1 + dy) - (H - 1))
    pr = max(0, (qw - 1 + dx) - (W - 1))
    xp = jnp.pad(x, ((0, 0), (pt, pb), (pltop, pr), (0, 0)))
    return xp[:, dy + pt: dy + pt + qh, dx + pltop: dx + pltop + qw, :]


def conv_transpose2d(x, w, b, stride, padding, output_padding, act, residual=None):
    """x: NHWC, w: (I, O, kH, kW) (PyTorch ConvTranspose2d layout), b: (O,).

    Output phase (r,c): y[s*q+r, s*q'+c] = sum over taps ky≡(r+p) mod s,
    kx≡(c+p) mod s of x[q+dy, q'+dx] @ w[:, :, ky, kx]  (exact PyTorch math).
    `residual` (same shape as the output) is added AFTER the activation.
    """
    I, O, kH, kW = w.shape
    N, H, W, C = x.shape
    assert C == I
    s, p, op = stride, padding, output_padding
    H_out = (H - 1) * s - 2 * p + kH + op
    W_out = (W - 1) * s - 2 * p + kW + op

    out = jnp.zeros((N, H_out, W_out, O), jnp.float32)
    for r in range(s):
        for c in range(s):
            qh = (H_out - 1 - r) // s + 1
            qw = (W_out - 1 - c) // s + 1
            if qh <= 0 or qw <= 0:
                continue
            taps_h = [(ky, (r + p - ky) // s) for ky in range(kH)
                      if (r + p - ky) % s == 0]
            taps_w = [(kx, (c + p - kx) // s) for kx in range(kW)
                      if (c + p - kx) % s == 0]
            res_phase = None
            if residual is not None:
                res_phase = residual[:, r::s, c::s, :].reshape(N * qh * qw, O)
            if not taps_h or not taps_w:
                # phase touched by no kernel tap -> just bias + activation
                val = b.astype(jnp.float32)
                if act == "relu":
                    val = jnp.maximum(val, 0.0)
                elif act == "sigmoid":
                    val = jax.nn.sigmoid(val)
                y = jnp.broadcast_to(val, (N, qh, qw, O))
                if res_phase is not None:
                    y = y + res_phase.reshape(N, qh, qw, O)
                out = out.at[:, r::s, c::s, :].set(y)
                continue
            cols, wmats = [], []
            for ky, dy in taps_h:
                for kx, dx in taps_w:
                    cols.append(_shifted_slice(x, dy, dx, qh, qw))
                    wmats.append(w[:, :, ky, kx])          # (I, O)
            A = jnp.concatenate(cols, axis=-1).reshape(N * qh * qw, len(cols) * C)
            Bm = jnp.concatenate(wmats, axis=0)            # (T*I, O)
            y = gemm_bias_act(A, Bm, b, act, residual=res_phase)
            out = out.at[:, r::s, c::s, :].set(y.reshape(N, qh, qw, O))
    return out


# ----------------------------------------------------------------------------
# conv_unet parameters + forward
# ----------------------------------------------------------------------------
def init_params(key, in_channels, middle_channels, k=3):
    """Deterministic init, PyTorch-style uniform(-1/sqrt(fan_in), 1/sqrt(fan_in))."""
    mc = middle_channels
    specs = {
        # Conv2d weights: (O, I, kH, kW)
        "e1_w": (mc[0], in_channels, k, k), "e1_b": (mc[0],),
        "e2_w": (mc[1], mc[0], k, k),       "e2_b": (mc[1],),
        "e3_w": (mc[2], mc[1], k, k),       "e3_b": (mc[2],),
        # ConvTranspose2d weights: (I, O, kH, kW)
        "d1_w": (mc[2], mc[1], k, k),       "d1_b": (mc[1],),
        "d2_w": (mc[1], mc[0], k, k),       "d2_b": (mc[0],),
        "d3_w": (mc[0], in_channels, k, k), "d3_b": (in_channels,),
    }
    fan_in = {
        "e1": in_channels * k * k, "e2": mc[0] * k * k, "e3": mc[1] * k * k,
        "d1": mc[2] * k * k, "d2": mc[1] * k * k, "d3": mc[0] * k * k,
    }
    params = {}
    keys = jax.random.split(key, len(specs))
    for kk, (name, shape) in zip(keys, sorted(specs.items())):
        bound = 1.0 / (fan_in[name[:2]] ** 0.5)
        params[name] = jax.random.uniform(
            kk, shape, jnp.float32, minval=-bound, maxval=bound
        )
    return params


def conv_unet_forward(params, image, mask):
    """image, mask: NCHW float32. Returns NCHW float32 (same as PyTorch module)."""
    x = jnp.transpose(image, (0, 2, 3, 1))  # NCHW -> NHWC
    m = jnp.transpose(mask, (0, 2, 3, 1))
    masked = masked_mul(x, m)

    enc1 = conv2d(masked, params["e1_w"], params["e1_b"], 2, 1, "relu")
    enc2 = conv2d(enc1,   params["e2_w"], params["e2_b"], 2, 1, "relu")
    enc3 = conv2d(enc2,   params["e3_w"], params["e3_b"], 2, 1, "relu")

    # skip-adds fused into the GEMM epilogue of the producing decoder layer:
    # d1_plus == relu(decoder1(enc3)) + enc2 ; d2_plus == relu(decoder2(...)) + enc1
    d1_plus = conv_transpose2d(enc3, params["d1_w"], params["d1_b"],
                               2, 1, 1, "relu", residual=enc2)
    d2_plus = conv_transpose2d(d1_plus, params["d2_w"], params["d2_b"],
                               2, 1, 1, "relu", residual=enc1)
    dec3 = conv_transpose2d(d2_plus, params["d3_w"], params["d3_b"],
                            2, 1, 1, "sigmoid")

    return jnp.transpose(dec3, (0, 3, 1, 2))  # NHWC -> NCHW


# ----------------------------------------------------------------------------
if __name__ == "__main__":
    batch, in_channels, spatial = 2, 3, 16
    middle_channels = [16, 32, 64]   # small instance of the module

    root = jax.random.PRNGKey(0)
    k_img, k_mask, k_par = jax.random.split(root, 3)

    image = jax.random.uniform(k_img, (batch, in_channels, spatial, spatial), jnp.float32)
    mask = (jax.random.uniform(k_mask, (batch, in_channels, spatial, spatial)) > 0.5
            ).astype(jnp.float32)

    params = init_params(k_par, in_channels, middle_channels)

    out = jax.jit(conv_unet_forward)(params, image, mask)
    out = jax.block_until_ready(out)

    assert out.shape == (batch, in_channels, spatial, spatial), out.shape
    assert bool(jnp.all(jnp.isfinite(out)))
    assert bool(jnp.all((out >= 0.0) & (out <= 1.0)))   # sigmoid output range

    print("KERNEL_OK")
</pallas_src>

<mosaic_0001>
module attributes {stable_mosaic.version = 11 : i64} {
  func.func @_mul_kernel(%arg0: i32, %arg1: memref<16x128xf32, #tpu.memory_space<vmem>>, %arg2: memref<16x128xf32, #tpu.memory_space<vmem>>, %arg3: memref<16x128xf32, #tpu.memory_space<vmem>>) attributes {dimension_semantics = [#tpu.dimension_semantics<parallel>], iteration_bounds = array<i64: 1>, scalar_prefetch = 0 : i64, scratch_operands = 0 : i64, tpu.core_type = #tpu.core_type<tc>, window_params = [{transform_indices = @transform_0, window_bounds = array<i64: 16, 128>}, {transform_indices = @transform_1, window_bounds = array<i64: 16, 128>}, {transform_indices = @transform_2, window_bounds = array<i64: 16, 128>}]} {
    %c0 = arith.constant 0 : index
    %c0_0 = arith.constant 0 : index
    %0 = vector.load %arg1[%c0, %c0_0] : memref<16x128xf32, #tpu.memory_space<vmem>>, vector<16x128xf32>
    %c0_1 = arith.constant 0 : index
    %c0_2 = arith.constant 0 : index
    %1 = vector.load %arg2[%c0_1, %c0_2] : memref<16x128xf32, #tpu.memory_space<vmem>>, vector<16x128xf32>
    %2 = arith.mulf %0, %1 : vector<16x128xf32>
    %c0_3 = arith.constant 0 : index
    %c0_4 = arith.constant 0 : index
    %3 = vector.load %arg3[%c0_3, %c0_4] : memref<16x128xf32, #tpu.memory_space<vmem>>, vector<16x128xf32>
    tpu.vector_store %arg3[%c0_3, %c0_4], %2 {strides = array<i32>} : memref<16x128xf32, #tpu.memory_space<vmem>>, vector<16x128xf32>,
    return
  }
  func.func @transform_0(%arg0: i32) -> (i32, i32) {
    %c0_i32 = arith.constant 0 : i32
    %c0_i32_0 = arith.constant 0 : i32
    return %arg0, %c0_i32 : i32, i32
  }
  func.func @transform_1(%arg0: i32) -> (i32, i32) {
    %c0_i32 = arith.constant 0 : i32
    %c0_i32_0 = arith.constant 0 : i32
    return %arg0, %c0_i32 : i32, i32
  }
  func.func @transform_2(%arg0: i32) -> (i32, i32) {
    %c0_i32 = arith.constant 0 : i32
    %c0_i32_0 = arith.constant 0 : i32
    return %arg0, %c0_i32 : i32, i32
  }
}

module attributes {stable_mosaic.version = 11 : i64} {
  func.func @_gemm_kernel(%arg0: i32, %arg1: i32, %arg2: i32, %arg3: memref<128x128xbf16, #tpu.memory_space<vmem>>, %arg4: memref<128x128xbf16, #tpu.memory_space<vmem>>, %arg5: memref<1x128xf32, #tpu.memory_space<vmem>>, %arg6: memref<128x128xf32, #tpu.memory_space<vmem>>, %arg7: memref<128x128xf32, #tpu.memory_space<vmem>>) attributes {dimension_semantics = [#tpu.dimension_semantics<parallel>, #tpu.dimension_semantics<parallel>, #tpu.dimension_semantics<arbitrary>], iteration_bounds = array<i64: 1, 1, 1>, scalar_prefetch = 0 : i64, scratch_operands = 1 : i64, tpu.core_type = #tpu.core_type<tc>, window_params = [{transform_indices = @transform_0, window_bounds = array<i64: 128, 128>}, {transform_indices = @transform_1, window_bounds = array<i64: 128, 128>}, {transform_indices = @transform_2, window_bounds = array<i64: 1, 128>}, {transform_indices = @transform_3, window_bounds = array<i64: 128, 128>}]} {
    %c0_i32 = arith.constant 0 : i32
    %0 = arith.cmpi eq, %arg2, %c0_i32 : i32
    %1 = arith.extui %0 : i1 to i32
    %c0_i32_0 = arith.constant 0 : i32
    %2 = arith.cmpi ne, %1, %c0_i32_0 : i32
    scf.if %2 {
      %cst_9 = arith.constant 0.000000e+00 : f32
      %15 = vector.broadcast %cst_9 : f32 to vector<128x128xf32>
      %c0_10 = arith.constant 0 : index
      %c0_11 = arith.constant 0 : index
      %16 = vector.load %arg7[%c0_10, %c0_11] : memref<128x128xf32, #tpu.memory_space<vmem>>, vector<128x128xf32>
      tpu.vector_store %arg7[%c0_10, %c0_11], %15 {strides = array<i32>} : memref<128x128xf32, #tpu.memory_space<vmem>>, vector<128x128xf32>,
    } else {
    }
    %c128_i32 = arith.constant 128 : i32
    %3 = arith.muli %arg2, %c128_i32 : i32
    %4 = tpu.assume_multiple %3, 128 : i32
    %c0 = arith.constant 0 : index
    %c0_1 = arith.constant 0 : index
    %5 = vector.load %arg7[%c0, %c0_1] : memref<128x128xf32, #tpu.memory_space<vmem>>, vector<128x128xf32>
    %c0_2 = arith.constant 0 : index
    %c0_3 = arith.constant 0 : index
    %6 = vector.load %arg3[%c0_2, %c0_3] : memref<128x128xbf16, #tpu.memory_space<vmem>>, vector<128x128xbf16>
    %7 = arith.index_cast %4 : i32 to index
    %c0_4 = arith.constant 0 : index
    %8 = vector.load %arg4[%7, %c0_4] : memref<128x128xbf16, #tpu.memory_space<vmem>>, vector<128x128xbf16>
    %cst = arith.constant dense<0.000000e+00> : vector<128x128xf32>
    %9 = tpu.matmul %6, %8, %cst {dimension_numbers = #tpu.dot_dimension_numbers<[1], [0], [0], [1], [0, 0, 1, 1], [], []>} : vector<128x128xbf16>, vector<128x128xbf16>, vector<128x128xf32> -> vector<128x128xf32>
    %10 = arith.addf %5, %9 : vector<128x128xf32>
    %c0_5 = arith.constant 0 : index
    %c0_6 = arith.constant 0 : index
    %11 = vector.load %arg7[%c0_5, %c0_6] : memref<128x128xf32, #tpu.memory_space<vmem>>, vector<128x128xf32>
    tpu.vector_store %arg7[%c0_5, %c0_6], %10 {strides = array<i32>} : memref<128x128xf32, #tpu.memory_space<vmem>>, vector<128x128xf32>,
    %c0_i32_7 = arith.constant 0 : i32
    %12 = arith.cmpi eq, %arg2, %c0_i32_7 : i32
    %13 = arith.extui %12 : i1 to i32
    %c0_i32_8 = arith.constant 0 : i32
    %14 = arith.cmpi ne, %13, %c0_i32_8 : i32
    scf.if %14 {
      %c0_9 = arith.constant 0 : index
      %c0_10 = arith.constant 0 : index
      %15 = vector.load %arg7[%c0_9, %c0_10] : memref<128x128xf32, #tpu.memory_space<vmem>>, vector<128x128xf32>
      %c0_11 = arith.constant 0 : index
      %c0_12 = arith.constant 0 : index
      %16 = vector.load %arg5[%c0_11, %c0_12] : memref<1x128xf32, #tpu.memory_space<vmem>>, vector<1x128xf32>
      %17 = vector.broadcast %16 : vector<1x128xf32> to vector<128x128xf32>
      %18 = arith.addf %15, %17 : vector<128x128xf32>
      %cst_13 = arith.constant 0.000000e+00 : f32
      %19 = vector.broadcast %cst_13 : f32 to vector<128x128xf32>
      %20 = arith.maximumf %18, %19 : vector<128x128xf32>
      %c0_14 = arith.constant 0 : index
      %c0_15 = arith.constant 0 : index
      %21 = vector.load %arg6[%c0_14, %c0_15] : memref<128x128xf32, #tpu.memory_space<vmem>>, vector<128x128xf32>
      tpu.vector_store %arg6[%c0_14, %c0_15], %20 {strides = array<i32>} : memref<128x128xf32, #tpu.memory_space<vmem>>, vector<128x128xf32>,
    } else {
    }
    return
  }
  func.func @transform_0(%arg0: i32, %arg1: i32, %arg2: i32) -> (i32, i32) {
    %c0_i32 = arith.constant 0 : i32
    return %arg1, %arg2 : i32, i32
  }
  func.func @transform_1(%arg0: i32, %arg1: i32, %arg2: i32) -> (i32, i32) {
    %c0_i32 = arith.constant 0 : i32
    %c0_i32_0 = arith.constant 0 : i32
    return %c0_i32, %arg0 : i32, i32
  }
  func.func @transform_2(%arg0: i32, %arg1: i32, %arg2: i32) -> (i32, i32) {
    %c0_i32 = arith.constant 0 : i32
    %c0_i32_0 = arith.constant 0 : i32
    return %c0_i32, %arg0 : i32, i32
  }
  func.func @transform_3(%arg0: i32, %arg1: i32, %arg2: i32) -> (i32, i32) {
    %c0_i32 = arith.constant 0 : i32
    return %arg1, %arg0 : i32, i32
  }
}

module attributes {stable_mosaic.version = 11 : i64} {
  func.func @_gemm_kernel(%arg0: i32, %arg1: i32, %arg2: i32, %arg3: memref<32x256xbf16, #tpu.memory_space<vmem>>, %arg4: memref<256x128xbf16, #tpu.memory_space<vmem>>, %arg5: memref<1x128xf32, #tpu.memory_space<vmem>>, %arg6: memref<32x128xf32, #tpu.memory_space<vmem>>, %arg7: memref<32x128xf32, #tpu.memory_space<vmem>>) attributes {dimension_semantics = [#tpu.dimension_semantics<parallel>, #tpu.dimension_semantics<parallel>, #tpu.dimension_semantics<arbitrary>], iteration_bounds = array<i64: 1, 1, 1>, scalar_prefetch = 0 : i64, scratch_operands = 1 : i64, tpu.core_type = #tpu.core_type<tc>, window_params = [{transform_indices = @transform_0, window_bounds = array<i64: 32, 256>}, {transform_indices = @transform_1, window_bounds = array<i64: 256, 128>}, {transform_indices = @transform_2, window_bounds = array<i64: 1, 128>}, {transform_indices = @transform_3, window_bounds = array<i64: 32, 128>}]} {
    %c0_i32 = arith.constant 0 : i32
    %0 = arith.cmpi eq, %arg2, %c0_i32 : i32
    %1 = arith.extui %0 : i1 to i32
    %c0_i32_0 = arith.constant 0 : i32
    %2 = arith.cmpi ne, %1, %c0_i32_0 : i32
    scf.if %2 {
      %cst_9 = arith.constant 0.000000e+00 : f32
      %15 = vector.broadcast %cst_9 : f32 to vector<32x128xf32>
      %c0_10 = arith.constant 0 : index
      %c0_11 = arith.constant 0 : index
      %16 = vector.load %arg7[%c0_10, %c0_11] : memref<32x128xf32, #tpu.memory_space<vmem>>, vector<32x128xf32>
      tpu.vector_store %arg7[%c0_10, %c0_11], %15 {strides = array<i32>} : memref<32x128xf32, #tpu.memory_space<vmem>>, vector<32x128xf32>,
    } else {
    }
    %c256_i32 = arith.constant 256 : i32
    %3 = arith.muli %arg2, %c256_i32 : i32
    %4 = tpu.assume_multiple %3, 256 : i32
    %c0 = arith.constant 0 : index
    %c0_1 = arith.constant 0 : index
    %5 = vector.load %arg7[%c0, %c0_1] : memref<32x128xf32, #tpu.memory_space<vmem>>, vector<32x128xf32>
    %c0_2 = arith.constant 0 : index
    %c0_3 = arith.constant 0 : index
    %6 = vector.load %arg3[%c0_2, %c0_3] : memref<32x256xbf16, #tpu.memory_space<vmem>>, vector<32x256xbf16>
    %7 = arith.index_cast %4 : i32 to index
    %c0_4 = arith.constant 0 : index
    %8 = vector.load %arg4[%7, %c0_4] : memref<256x128xbf16, #tpu.memory_space<vmem>>, vector<256x128xbf16>
    %cst = arith.constant dense<0.000000e+00> : vector<32x128xf32>
    %9 = tpu.matmul %6, %8, %cst {dimension_numbers = #tpu.dot_dimension_numbers<[1], [0], [0], [1], [0, 0, 1, 1], [], []>} : vector<32x256xbf16>, vector<256x128xbf16>, vector<32x128xf32> -> vector<32x128xf32>
    %10 = arith.addf %5, %9 : vector<32x128xf32>
    %c0_5 = arith.constant 0 : index
    %c0_6 = arith.constant 0 : index
    %11 = vector.load %arg7[%c0_5, %c0_6] : memref<32x128xf32, #tpu.memory_space<vmem>>, vector<32x128xf32>
    tpu.vector_store %arg7[%c0_5, %c0_6], %10 {strides = array<i32>} : memref<32x128xf32, #tpu.memory_space<vmem>>, vector<32x128xf32>,
    %c0_i32_7 = arith.constant 0 : i32
    %12 = arith.cmpi eq, %arg2, %c0_i32_7 : i32
    %13 = arith.extui %12 : i1 to i32
    %c0_i32_8 = arith.constant 0 : i32
    %14 = arith.cmpi ne, %13, %c0_i32_8 : i32
    scf.if %14 {
      %c0_9 = arith.constant 0 : index
      %c0_10 = arith.constant 0 : index
      %15 = vector.load %arg7[%c0_9, %c0_10] : memref<32x128xf32, #tpu.memory_space<vmem>>, vector<32x128xf32>
      %c0_11 = arith.constant 0 : index
      %c0_12 = arith.constant 0 : index
      %16 = vector.load %arg5[%c0_11, %c0_12] : memref<1x128xf32, #tpu.memory_space<vmem>>, vector<1x128xf32>
      %17 = vector.broadcast %16 : vector<1x128xf32> to vector<32x128xf32>
      %18 = arith.addf %15, %17 : vector<32x128xf32>
      %cst_13 = arith.constant 0.000000e+00 : f32
      %19 = vector.broadcast %cst_13 : f32 to vector<32x128xf32>
      %20 = arith.maximumf %18, %19 : vector<32x128xf32>
      %c0_14 = arith.constant 0 : index
      %c0_15 = arith.constant 0 : index
      %21 = vector.load %arg6[%c0_14, %c0_15] : memref<32x128xf32, #tpu.memory_space<vmem>>, vector<32x128xf32>
      tpu.vector_store %arg6[%c0_14, %c0_15], %20 {strides = array<i32>} : memref<32x128xf32, #tpu.memory_space<vmem>>, vector<32x128xf32>,
    } else {
    }
    return
  }
  func.func @transform_0(%arg0: i32, %arg1: i32, %arg2: i32) -> (i32, i32) {
    %c0_i32 = arith.constant 0 : i32
    return %arg1, %arg2 : i32, i32
  }
  func.func @transform_1(%arg0: i32, %arg1: i32, %arg2: i32) -> (i32, i32) {
    %c0_i32 = arith.constant 0 : i32
    %c0_i32_0 = arith.constant 0 : i32
    return %c0_i32, %arg0 : i32, i32
  }
  func.func @transform_2(%arg0: i32, %arg1: i32, %arg2: i32) -> (i32, i32) {
    %c0_i32 = arith.constant 0 : i32
    %c0_i32_0 = arith.constant 0 : i32
    return %c0_i32, %arg0 : i32, i32
  }
  func.func @transform_3(%arg0: i32, %arg1: i32, %arg2: i32) -> (i32, i32) {
    %c0_i32 = arith.constant 0 : i32
    return %arg1, %arg0 : i32, i32
  }
}

module attributes {stable_mosaic.version = 11 : i64} {
  func.func @_gemm_kernel(%arg0: i32, %arg1: i32, %arg2: i32, %arg3: memref<16x384xbf16, #tpu.memory_space<vmem>>, %arg4: memref<384x128xbf16, #tpu.memory_space<vmem>>, %arg5: memref<1x128xf32, #tpu.memory_space<vmem>>, %arg6: memref<16x128xf32, #tpu.memory_space<vmem>>, %arg7: memref<16x128xf32, #tpu.memory_space<vmem>>) attributes {dimension_semantics = [#tpu.dimension_semantics<parallel>, #tpu.dimension_semantics<parallel>, #tpu.dimension_semantics<arbitrary>], iteration_bounds = array<i64: 1, 1, 1>, scalar_prefetch = 0 : i64, scratch_operands = 1 : i64, tpu.core_type = #tpu.core_type<tc>, window_params = [{transform_indices = @transform_0, window_bounds = array<i64: 16, 384>}, {transform_indices = @transform_1, window_bounds = array<i64: 384, 128>}, {transform_indices = @transform_2, window_bounds = array<i64: 1, 128>}, {transform_indices = @transform_3, window_bounds = array<i64: 16, 128>}]} {
    %c0_i32 = arith.constant 0 : i32
    %0 = arith.cmpi eq, %arg2, %c0_i32 : i32
    %1 = arith.extui %0 : i1 to i32
    %c0_i32_0 = arith.constant 0 : i32
    %2 = arith.cmpi ne, %1, %c0_i32_0 : i32
    scf.if %2 {
      %cst_9 = arith.constant 0.000000e+00 : f32
      %15 = vector.broadcast %cst_9 : f32 to vector<16x128xf32>
      %c0_10 = arith.constant 0 : index
      %c0_11 = arith.constant 0 : index
      %16 = vector.load %arg7[%c0_10, %c0_11] : memref<16x128xf32, #tpu.memory_space<vmem>>, vector<16x128xf32>
      tpu.vector_store %arg7[%c0_10, %c0_11], %15 {strides = array<i32>} : memref<16x128xf32, #tpu.memory_space<vmem>>, vector<16x128xf32>,
    } else {
    }
    %c384_i32 = arith.constant 384 : i32
    %3 = arith.muli %arg2, %c384_i32 : i32
    %4 = tpu.assume_multiple %3, 384 : i32
    %c0 = arith.constant 0 : index
    %c0_1 = arith.constant 0 : index
    %5 = vector.load %arg7[%c0, %c0_1] : memref<16x128xf32, #tpu.memory_space<vmem>>, vector<16x128xf32>
    %c0_2 = arith.constant 0 : index
    %c0_3 = arith.constant 0 : index
    %6 = vector.load %arg3[%c0_2, %c0_3] : memref<16x384xbf16, #tpu.memory_space<vmem>>, vector<16x384xbf16>
    %7 = arith.index_cast %4 : i32 to index
    %c0_4 = arith.constant 0 : index
    %8 = vector.load %arg4[%7, %c0_4] : memref<384x128xbf16, #tpu.memory_space<vmem>>, vector<384x128xbf16>
    %cst = arith.constant dense<0.000000e+00> : vector<16x128xf32>
    %9 = tpu.matmul %6, %8, %cst {dimension_numbers = #tpu.dot_dimension_numbers<[1], [0], [0], [1], [0, 0, 1, 1], [], []>} : vector<16x384xbf16>, vector<384x128xbf16>, vector<16x128xf32> -> vector<16x128xf32>
    %10 = arith.addf %5, %9 : vector<16x128xf32>
    %c0_5 = arith.constant 0 : index
    %c0_6 = arith.constant 0 : index
    %11 = vector.load %arg7[%c0_5, %c0_6] : memref<16x128xf32, #tpu.memory_space<vmem>>, vector<16x128xf32>
    tpu.vector_store %arg7[%c0_5, %c0_6], %10 {strides = array<i32>} : memref<16x128xf32, #tpu.memory_space<vmem>>, vector<16x128xf32>,
    %c0_i32_7 = arith.constant 0 : i32
    %12 = arith.cmpi eq, %arg2, %c0_i32_7 : i32
    %13 = arith.extui %12 : i1 to i32
    %c0_i32_8 = arith.constant 0 : i32
    %14 = arith.cmpi ne, %13, %c0_i32_8 : i32
    scf.if %14 {
      %c0_9 = arith.constant 0 : index
      %c0_10 = arith.constant 0 : index
      %15 = vector.load %arg7[%c0_9, %c0_10] : memref<16x128xf32, #tpu.memory_space<vmem>>, vector<16x128xf32>
      %c0_11 = arith.constant 0 : index
      %c0_12 = arith.constant 0 : index
      %16 = vector.load %arg5[%c0_11, %c0_12] : memref<1x128xf32, #tpu.memory_space<vmem>>, vector<1x128xf32>
      %17 = vector.broadcast %16 : vector<1x128xf32> to vector<16x128xf32>
      %18 = arith.addf %15, %17 : vector<16x128xf32>
      %cst_13 = arith.constant 0.000000e+00 : f32
      %19 = vector.broadcast %cst_13 : f32 to vector<16x128xf32>
      %20 = arith.maximumf %18, %19 : vector<16x128xf32>
      %c0_14 = arith.constant 0 : index
      %c0_15 = arith.constant 0 : index
      %21 = vector.load %arg6[%c0_14, %c0_15] : memref<16x128xf32, #tpu.memory_space<vmem>>, vector<16x128xf32>
      tpu.vector_store %arg6[%c0_14, %c0_15], %20 {strides = array<i32>} : memref<16x128xf32, #tpu.memory_space<vmem>>, vector<16x128xf32>,
    } else {
    }
    return
  }
  func.func @transform_0(%arg0: i32, %arg1: i32, %arg2: i32) -> (i32, i32) {
    %c0_i32 = arith.constant 0 : i32
    return %arg1, %arg2 : i32, i32
  }
  func.func @transform_1(%arg0: i32, %arg1: i32, %arg2: i32) -> (i32, i32) {
    %c0_i32 = arith.constant 0 : i32
    %c0_i32_0 = arith.constant 0 : i32
    return %c0_i32, %arg0 : i32, i32
  }
  func.func @transform_2(%arg0: i32, %arg1: i32, %arg2: i32) -> (i32, i32) {
    %c0_i32 = arith.constant 0 : i32
    %c0_i32_0 = arith.constant 0 : i32
    return %c0_i32, %arg0 : i32, i32
  }
  func.func @transform_3(%arg0: i32, %arg1: i32, %arg2: i32) -> (i32, i32) {
    %c0_i32 = arith.constant 0 : i32
    return %arg1, %arg0 : i32, i32
  }
}

module attributes {stable_mosaic.version = 11 : i64} {
  func.func @_gemm_kernel(%arg0: i32, %arg1: i32, %arg2: i32, %arg3: memref<16x256xbf16, #tpu.memory_space<vmem>>, %arg4: memref<256x128xbf16, #tpu.memory_space<vmem>>, %arg5: memref<1x128xf32, #tpu.memory_space<vmem>>, %arg6: memref<16x128xf32, #tpu.memory_space<vmem>>, %arg7: memref<16x128xf32, #tpu.memory_space<vmem>>, %arg8: memref<16x128xf32, #tpu.memory_space<vmem>>) attributes {dimension_semantics = [#tpu.dimension_semantics<parallel>, #tpu.dimension_semantics<parallel>, #tpu.dimension_semantics<arbitrary>], iteration_bounds = array<i64: 1, 1, 1>, scalar_prefetch = 0 : i64, scratch_operands = 1 : i64, tpu.core_type = #tpu.core_type<tc>, window_params = [{transform_indices = @transform_0, window_bounds = array<i64: 16, 256>}, {transform_indices = @transform_1, window_bounds = array<i64: 256, 128>}, {transform_indices = @transform_2, window_bounds = array<i64: 1, 128>}, {transform_indices = @transform_3, window_bounds = array<i64: 16, 128>}, {transform_indices = @transform_4, window_bounds = array<i64: 16, 128>}]} {
    %c0_i32 = arith.constant 0 : i32
    %0 = arith.cmpi eq, %arg2, %c0_i32 : i32
    %1 = arith.extui %0 : i1 to i32
    %c0_i32_0 = arith.constant 0 : i32
    %2 = arith.cmpi ne, %1, %c0_i32_0 : i32
    scf.if %2 {
      %cst_9 = arith.constant 0.000000e+00 : f32
      %15 = vector.broadcast %cst_9 : f32 to vector<16x128xf32>
      %c0_10 = arith.constant 0 : index
      %c0_11 = arith.constant 0 : index
      %16 = vector.load %arg8[%c0_10, %c0_11] : memref<16x128xf32, #tpu.memory_space<vmem>>, vector<16x128xf32>
      tpu.vector_store %arg8[%c0_10, %c0_11], %15 {strides = array<i32>} : memref<16x128xf32, #tpu.memory_space<vmem>>, vector<16x128xf32>,
    } else {
    }
    %c256_i32 = arith.constant 256 : i32
    %3 = arith.muli %arg2, %c256_i32 : i32
    %4 = tpu.assume_multiple %3, 256 : i32
    %c0 = arith.constant 0 : index
    %c0_1 = arith.constant 0 : index
    %5 = vector.load %arg8[%c0, %c0_1] : memref<16x128xf32, #tpu.memory_space<vmem>>, vector<16x128xf32>
    %c0_2 = arith.constant 0 : index
    %c0_3 = arith.constant 0 : index
    %6 = vector.load %arg3[%c0_2, %c0_3] : memref<16x256xbf16, #tpu.memory_space<vmem>>, vector<16x256xbf16>
    %7 = arith.index_cast %4 : i32 to index
    %c0_4 = arith.constant 0 : index
    %8 = vector.load %arg4[%7, %c0_4] : memref<256x128xbf16, #tpu.memory_space<vmem>>, vector<256x128xbf16>
    %cst = arith.constant dense<0.000000e+00> : vector<16x128xf32>
    %9 = tpu.matmul %6, %8, %cst {dimension_numbers = #tpu.dot_dimension_numbers<[1], [0], [0], [1], [0, 0, 1, 1], [], []>} : vector<16x256xbf16>, vector<256x128xbf16>, vector<16x128xf32> -> vector<16x128xf32>
    %10 = arith.addf %5, %9 : vector<16x128xf32>
    %c0_5 = arith.constant 0 : index
    %c0_6 = arith.constant 0 : index
    %11 = vector.load %arg8[%c0_5, %c0_6] : memref<16x128xf32, #tpu.memory_space<vmem>>, vector<16x128xf32>
    tpu.vector_store %arg8[%c0_5, %c0_6], %10 {strides = array<i32>} : memref<16x128xf32, #tpu.memory_space<vmem>>, vector<16x128xf32>,
    %c0_i32_7 = arith.constant 0 : i32
    %12 = arith.cmpi eq, %arg2, %c0_i32_7 : i32
    %13 = arith.extui %12 : i1 to i32
    %c0_i32_8 = arith.constant 0 : i32
    %14 = arith.cmpi ne, %13, %c0_i32_8 : i32
    scf.if %14 {
      %c0_9 = arith.constant 0 : index
      %c0_10 = arith.constant 0 : index
      %15 = vector.load %arg8[%c0_9, %c0_10] : memref<16x128xf32, #tpu.memory_space<vmem>>, vector<16x128xf32>
      %c0_11 = arith.constant 0 : index
      %c0_12 = arith.constant 0 : index
      %16 = vector.load %arg5[%c0_11, %c0_12] : memref<1x128xf32, #tpu.memory_space<vmem>>, vector<1x128xf32>
      %17 = vector.broadcast %16 : vector<1x128xf32> to vector<16x128xf32>
      %18 = arith.addf %15, %17 : vector<16x128xf32>
      %cst_13 = arith.constant 0.000000e+00 : f32
      %19 = vector.broadcast %cst_13 : f32 to vector<16x128xf32>
      %20 = arith.maximumf %18, %19 : vector<16x128xf32>
      %c0_14 = arith.constant 0 : index
      %c0_15 = arith.constant 0 : index
      %21 = vector.load %arg6[%c0_14, %c0_15] : memref<16x128xf32, #tpu.memory_space<vmem>>, vector<16x128xf32>
      %22 = arith.addf %20, %21 : vector<16x128xf32>
      %c0_16 = arith.constant 0 : index
      %c0_17 = arith.constant 0 : index
      %23 = vector.load %arg7[%c0_16, %c0_17] : memref<16x128xf32, #tpu.memory_space<vmem>>, vector<16x128xf32>
      tpu.vector_store %arg7[%c0_16, %c0_17], %22 {strides = array<i32>} : memref<16x128xf32, #tpu.memory_space<vmem>>, vector<16x128xf32>,
    } else {
    }
    return
  }
  func.func @transform_0(%arg0: i32, %arg1: i32, %arg2: i32) -> (i32, i32) {
    %c0_i32 = arith.constant 0 : i32
    return %arg1, %arg2 : i32, i32
  }
  func.func @transform_1(%arg0: i32, %arg1: i32, %arg2: i32) -> (i32, i32) {
    %c0_i32 = arith.constant 0 : i32
    %c0_i32_0 = arith.constant 0 : i32
    return %c0_i32, %arg0 : i32, i32
  }
  func.func @transform_2(%arg0: i32, %arg1: i32, %arg2: i32) -> (i32, i32) {
    %c0_i32 = arith.constant 0 : i32
    %c0_i32_0 = arith.constant 0 : i32
    return %c0_i32, %arg0 : i32, i32
  }
  func.func @transform_3(%arg0: i32, %arg1: i32, %arg2: i32) -> (i32, i32) {
    %c0_i32 = arith.constant 0 : i32
    return %arg1, %arg0 : i32, i32
  }
  func.func @transform_4(%arg0: i32, %arg1: i32, %arg2: i32) -> (i32, i32) {
    %c0_i32 = arith.constant 0 : i32
    return %arg1, %arg0 : i32, i32
  }
}

module attributes {stable_mosaic.version = 11 : i64} {
  func.func @_gemm_kernel(%arg0: i32, %arg1: i32, %arg2: i32, %arg3: memref<16x128xbf16, #tpu.memory_space<vmem>>, %arg4: memref<128x128xbf16, #tpu.memory_space<vmem>>, %arg5: memref<1x128xf32, #tpu.memory_space<vmem>>, %arg6: memref<16x128xf32, #tpu.memory_space<vmem>>, %arg7: memref<16x128xf32, #tpu.memory_space<vmem>>, %arg8: memref<16x128xf32, #tpu.memory_space<vmem>>) attributes {dimension_semantics = [#tpu.dimension_semantics<parallel>, #tpu.dimension_semantics<parallel>, #tpu.dimension_semantics<arbitrary>], iteration_bounds = array<i64: 1, 1, 1>, scalar_prefetch = 0 : i64, scratch_operands = 1 : i64, tpu.core_type = #tpu.core_type<tc>, window_params = [{transform_indices = @transform_0, window_bounds = array<i64: 16, 128>}, {transform_indices = @transform_1, window_bounds = array<i64: 128, 128>}, {transform_indices = @transform_2, window_bounds = array<i64: 1, 128>}, {transform_indices = @transform_3, window_bounds = array<i64: 16, 128>}, {transform_indices = @transform_4, window_bounds = array<i64: 16, 128>}]} {
    %c0_i32 = arith.constant 0 : i32
    %0 = arith.cmpi eq, %arg2, %c0_i32 : i32
    %1 = arith.extui %0 : i1 to i32
    %c0_i32_0 = arith.constant 0 : i32
    %2 = arith.cmpi ne, %1, %c0_i32_0 : i32
    scf.if %2 {
      %cst_9 = arith.constant 0.000000e+00 : f32
      %15 = vector.broadcast %cst_9 : f32 to vector<16x128xf32>
      %c0_10 = arith.constant 0 : index
      %c0_11 = arith.constant 0 : index
      %16 = vector.load %arg8[%c0_10, %c0_11] : memref<16x128xf32, #tpu.memory_space<vmem>>, vector<16x128xf32>
      tpu.vector_store %arg8[%c0_10, %c0_11], %15 {strides = array<i32>} : memref<16x128xf32, #tpu.memory_space<vmem>>, vector<16x128xf32>,
    } else {
    }
    %c128_i32 = arith.constant 128 : i32
    %3 = arith.muli %arg2, %c128_i32 : i32
    %4 = tpu.assume_multiple %3, 128 : i32
    %c0 = arith.constant 0 : index
    %c0_1 = arith.constant 0 : index
    %5 = vector.load %arg8[%c0, %c0_1] : memref<16x128xf32, #tpu.memory_space<vmem>>, vector<16x128xf32>
    %c0_2 = arith.constant 0 : index
    %c0_3 = arith.constant 0 : index
    %6 = vector.load %arg3[%c0_2, %c0_3] : memref<16x128xbf16, #tpu.memory_space<vmem>>, vector<16x128xbf16>
    %7 = arith.index_cast %4 : i32 to index
    %c0_4 = arith.constant 0 : index
    %8 = vector.load %arg4[%7, %c0_4] : memref<128x128xbf16, #tpu.memory_space<vmem>>, vector<128x128xbf16>
    %cst = arith.constant dense<0.000000e+00> : vector<16x128xf32>
    %9 = tpu.matmul %6, %8, %cst {dimension_numbers = #tpu.dot_dimension_numbers<[1], [0], [0], [1], [0, 0, 1, 1], [], []>} : vector<16x128xbf16>, vector<128x128xbf16>, vector<16x128xf32> -> vector<16x128xf32>
    %10 = arith.addf %5, %9 : vector<16x128xf32>
    %c0_5 = arith.constant 0 : index
    %c0_6 = arith.constant 0 : index
    %11 = vector.load %arg8[%c0_5, %c0_6] : memref<16x128xf32, #tpu.memory_space<vmem>>, vector<16x128xf32>
    tpu.vector_store %arg8[%c0_5, %c0_6], %10 {strides = array<i32>} : memref<16x128xf32, #tpu.memory_space<vmem>>, vector<16x128xf32>,
    %c0_i32_7 = arith.constant 0 : i32
    %12 = arith.cmpi eq, %arg2, %c0_i32_7 : i32
    %13 = arith.extui %12 : i1 to i32
    %c0_i32_8 = arith.constant 0 : i32
    %14 = arith.cmpi ne, %13, %c0_i32_8 : i32
    scf.if %14 {
      %c0_9 = arith.constant 0 : index
      %c0_10 = arith.constant 0 : index
      %15 = vector.load %arg8[%c0_9, %c0_10] : memref<16x128xf32, #tpu.memory_space<vmem>>, vector<16x128xf32>
      %c0_11 = arith.constant 0 : index
      %c0_12 = arith.constant 0 : index
      %16 = vector.load %arg5[%c0_11, %c0_12] : memref<1x128xf32, #tpu.memory_space<vmem>>, vector<1x128xf32>
      %17 = vector.broadcast %16 : vector<1x128xf32> to vector<16x128xf32>
      %18 = arith.addf %15, %17 : vector<16x128xf32>
      %cst_13 = arith.constant 0.000000e+00 : f32
      %19 = vector.broadcast %cst_13 : f32 to vector<16x128xf32>
      %20 = arith.maximumf %18, %19 : vector<16x128xf32>
      %c0_14 = arith.constant 0 : index
      %c0_15 = arith.constant 0 : index
      %21 = vector.load %arg6[%c0_14, %c0_15] : memref<16x128xf32, #tpu.memory_space<vmem>>, vector<16x128xf32>
      %22 = arith.addf %20, %21 : vector<16x128xf32>
      %c0_16 = arith.constant 0 : index
      %c0_17 = arith.constant 0 : index
      %23 = vector.load %arg7[%c0_16, %c0_17] : memref<16x128xf32, #tpu.memory_space<vmem>>, vector<16x128xf32>
      tpu.vector_store %arg7[%c0_16, %c0_17], %22 {strides = array<i32>} : memref<16x128xf32, #tpu.memory_space<vmem>>, vector<16x128xf32>,
    } else {
    }
    return
  }
  func.func @transform_0(%arg0: i32, %arg1: i32, %arg2: i32) -> (i32, i32) {
    %c0_i32 = arith.constant 0 : i32
    return %arg1, %arg2 : i32, i32
  }
  func.func @transform_1(%arg0: i32, %arg1: i32, %arg2: i32) -> (i32, i32) {
    %c0_i32 = arith.constant 0 : i32
    %c0_i32_0 = arith.constant 0 : i32
    return %c0_i32, %arg0 : i32, i32
  }
  func.func @transform_2(%arg0: i32, %arg1: i32, %arg2: i32) -> (i32, i32) {
    %c0_i32 = arith.constant 0 : i32
    %c0_i32_0 = arith.constant 0 : i32
    return %c0_i32, %arg0 : i32, i32
  }
  func.func @transform_3(%arg0: i32, %arg1: i32, %arg2: i32) -> (i32, i32) {
    %c0_i32 = arith.constant 0 : i32
    return %arg1, %arg0 : i32, i32
  }
  func.func @transform_4(%arg0: i32, %arg1: i32, %arg2: i32) -> (i32, i32) {
    %c0_i32 = arith.constant 0 : i32
    return %arg1, %arg0 : i32, i32
  }
}

module attributes {stable_mosaic.version = 11 : i64} {
  func.func @_gemm_kernel(%arg0: i32, %arg1: i32, %arg2: i32, %arg3: memref<32x128xbf16, #tpu.memory_space<vmem>>, %arg4: memref<128x128xbf16, #tpu.memory_space<vmem>>, %arg5: memref<1x128xf32, #tpu.memory_space<vmem>>, %arg6: memref<32x128xf32, #tpu.memory_space<vmem>>, %arg7: memref<32x128xf32, #tpu.memory_space<vmem>>, %arg8: memref<32x128xf32, #tpu.memory_space<vmem>>) attributes {dimension_semantics = [#tpu.dimension_semantics<parallel>, #tpu.dimension_semantics<parallel>, #tpu.dimension_semantics<arbitrary>], iteration_bounds = array<i64: 1, 1, 1>, scalar_prefetch = 0 : i64, scratch_operands = 1 : i64, tpu.core_type = #tpu.core_type<tc>, window_params = [{transform_indices = @transform_0, window_bounds = array<i64: 32, 128>}, {transform_indices = @transform_1, window_bounds = array<i64: 128, 128>}, {transform_indices = @transform_2, window_bounds = array<i64: 1, 128>}, {transform_indices = @transform_3, window_bounds = array<i64: 32, 128>}, {transform_indices = @transform_4, window_bounds = array<i64: 32, 128>}]} {
    %c0_i32 = arith.constant 0 : i32
    %0 = arith.cmpi eq, %arg2, %c0_i32 : i32
    %1 = arith.extui %0 : i1 to i32
    %c0_i32_0 = arith.constant 0 : i32
    %2 = arith.cmpi ne, %1, %c0_i32_0 : i32
    scf.if %2 {
      %cst_9 = arith.constant 0.000000e+00 : f32
      %15 = vector.broadcast %cst_9 : f32 to vector<32x128xf32>
      %c0_10 = arith.constant 0 : index
      %c0_11 = arith.constant 0 : index
      %16 = vector.load %arg8[%c0_10, %c0_11] : memref<32x128xf32, #tpu.memory_space<vmem>>, vector<32x128xf32>
      tpu.vector_store %arg8[%c0_10, %c0_11], %15 {strides = array<i32>} : memref<32x128xf32, #tpu.memory_space<vmem>>, vector<32x128xf32>,
    } else {
    }
    %c128_i32 = arith.constant 128 : i32
    %3 = arith.muli %arg2, %c128_i32 : i32
    %4 = tpu.assume_multiple %3, 128 : i32
    %c0 = arith.constant 0 : index
    %c0_1 = arith.constant 0 : index
    %5 = vector.load %arg8[%c0, %c0_1] : memref<32x128xf32, #tpu.memory_space<vmem>>, vector<32x128xf32>
    %c0_2 = arith.constant 0 : index
    %c0_3 = arith.constant 0 : index
    %6 = vector.load %arg3[%c0_2, %c0_3] : memref<32x128xbf16, #tpu.memory_space<vmem>>, vector<32x128xbf16>
    %7 = arith.index_cast %4 : i32 to index
    %c0_4 = arith.constant 0 : index
    %8 = vector.load %arg4[%7, %c0_4] : memref<128x128xbf16, #tpu.memory_space<vmem>>, vector<128x128xbf16>
    %cst = arith.constant dense<0.000000e+00> : vector<32x128xf32>
    %9 = tpu.matmul %6, %8, %cst {dimension_numbers = #tpu.dot_dimension_numbers<[1], [0], [0], [1], [0, 0, 1, 1], [], []>} : vector<32x128xbf16>, vector<128x128xbf16>, vector<32x128xf32> -> vector<32x128xf32>
    %10 = arith.addf %5, %9 : vector<32x128xf32>
    %c0_5 = arith.constant 0 : index
    %c0_6 = arith.constant 0 : index
    %11 = vector.load %arg8[%c0_5, %c0_6] : memref<32x128xf32, #tpu.memory_space<vmem>>, vector<32x128xf32>
    tpu.vector_store %arg8[%c0_5, %c0_6], %10 {strides = array<i32>} : memref<32x128xf32, #tpu.memory_space<vmem>>, vector<32x128xf32>,
    %c0_i32_7 = arith.constant 0 : i32
    %12 = arith.cmpi eq, %arg2, %c0_i32_7 : i32
    %13 = arith.extui %12 : i1 to i32
    %c0_i32_8 = arith.constant 0 : i32
    %14 = arith.cmpi ne, %13, %c0_i32_8 : i32
    scf.if %14 {
      %c0_9 = arith.constant 0 : index
      %c0_10 = arith.constant 0 : index
      %15 = vector.load %arg8[%c0_9, %c0_10] : memref<32x128xf32, #tpu.memory_space<vmem>>, vector<32x128xf32>
      %c0_11 = arith.constant 0 : index
      %c0_12 = arith.constant 0 : index
      %16 = vector.load %arg5[%c0_11, %c0_12] : memref<1x128xf32, #tpu.memory_space<vmem>>, vector<1x128xf32>
      %17 = vector.broadcast %16 : vector<1x128xf32> to vector<32x128xf32>
      %18 = arith.addf %15, %17 : vector<32x128xf32>
      %cst_13 = arith.constant 0.000000e+00 : f32
      %19 = vector.broadcast %cst_13 : f32 to vector<32x128xf32>
      %20 = arith.maximumf %18, %19 : vector<32x128xf32>
      %c0_14 = arith.constant 0 : index
      %c0_15 = arith.constant 0 : index
      %21 = vector.load %arg6[%c0_14, %c0_15] : memref<32x128xf32, #tpu.memory_space<vmem>>, vector<32x128xf32>
      %22 = arith.addf %20, %21 : vector<32x128xf32>
      %c0_16 = arith.constant 0 : index
      %c0_17 = arith.constant 0 : index
      %23 = vector.load %arg7[%c0_16, %c0_17] : memref<32x128xf32, #tpu.memory_space<vmem>>, vector<32x128xf32>
      tpu.vector_store %arg7[%c0_16, %c0_17], %22 {strides = array<i32>} : memref<32x128xf32, #tpu.memory_space<vmem>>, vector<32x128xf32>,
    } else {
    }
    return
  }
  func.func @transform_0(%arg0: i32, %arg1: i32, %arg2: i32) -> (i32, i32) {
    %c0_i32 = arith.constant 0 : i32
    return %arg1, %arg2 : i32, i32
  }
  func.func @transform_1(%arg0: i32, %arg1: i32, %arg2: i32) -> (i32, i32) {
    %c0_i32 = arith.constant 0 : i32
    %c0_i32_0 = arith.constant 0 : i32
    return %c0_i32, %arg0 : i32, i32
  }
  func.func @transform_2(%arg0: i32, %arg1: i32, %arg2: i32) -> (i32, i32) {
    %c0_i32 = arith.constant 0 : i32
    %c0_i32_0 = arith.constant 0 : i32
    return %c0_i32, %arg0 : i32, i32
  }
  func.func @transform_3(%arg0: i32, %arg1: i32, %arg2: i32) -> (i32, i32) {
    %c0_i32 = arith.constant 0 : i32
    return %arg1, %arg0 : i32, i32
  }
  func.func @transform_4(%arg0: i32, %arg1: i32, %arg2: i32) -> (i32, i32) {
    %c0_i32 = arith.constant 0 : i32
    return %arg1, %arg0 : i32, i32
  }
}

module attributes {stable_mosaic.version = 11 : i64} {
  func.func @_gemm_kernel(%arg0: i32, %arg1: i32, %arg2: i32, %arg3: memref<128x128xbf16, #tpu.memory_space<vmem>>, %arg4: memref<128x128xbf16, #tpu.memory_space<vmem>>, %arg5: memref<1x128xf32, #tpu.memory_space<vmem>>, %arg6: memref<128x128xf32, #tpu.memory_space<vmem>>, %arg7: memref<128x128xf32, #tpu.memory_space<vmem>>) attributes {dimension_semantics = [#tpu.dimension_semantics<parallel>, #tpu.dimension_semantics<parallel>, #tpu.dimension_semantics<arbitrary>], iteration_bounds = array<i64: 1, 1, 1>, scalar_prefetch = 0 : i64, scratch_operands = 1 : i64, tpu.core_type = #tpu.core_type<tc>, window_params = [{transform_indices = @transform_0, window_bounds = array<i64: 128, 128>}, {transform_indices = @transform_1, window_bounds = array<i64: 128, 128>}, {transform_indices = @transform_2, window_bounds = array<i64: 1, 128>}, {transform_indices = @transform_3, window_bounds = array<i64: 128, 128>}]} {
    %c0_i32 = arith.constant 0 : i32
    %0 = arith.cmpi eq, %arg2, %c0_i32 : i32
    %1 = arith.extui %0 : i1 to i32
    %c0_i32_0 = arith.constant 0 : i32
    %2 = arith.cmpi ne, %1, %c0_i32_0 : i32
    scf.if %2 {
      %cst_9 = arith.constant 0.000000e+00 : f32
      %15 = vector.broadcast %cst_9 : f32 to vector<128x128xf32>
      %c0_10 = arith.constant 0 : index
      %c0_11 = arith.constant 0 : index
      %16 = vector.load %arg7[%c0_10, %c0_11] : memref<128x128xf32, #tpu.memory_space<vmem>>, vector<128x128xf32>
      tpu.vector_store %arg7[%c0_10, %c0_11], %15 {strides = array<i32>} : memref<128x128xf32, #tpu.memory_space<vmem>>, vector<128x128xf32>,
    } else {
    }
    %c128_i32 = arith.constant 128 : i32
    %3 = arith.muli %arg2, %c128_i32 : i32
    %4 = tpu.assume_multiple %3, 128 : i32
    %c0 = arith.constant 0 : index
    %c0_1 = arith.constant 0 : index
    %5 = vector.load %arg7[%c0, %c0_1] : memref<128x128xf32, #tpu.memory_space<vmem>>, vector<128x128xf32>
    %c0_2 = arith.constant 0 : index
    %c0_3 = arith.constant 0 : index
    %6 = vector.load %arg3[%c0_2, %c0_3] : memref<128x128xbf16, #tpu.memory_space<vmem>>, vector<128x128xbf16>
    %7 = arith.index_cast %4 : i32 to index
    %c0_4 = arith.constant 0 : index
    %8 = vector.load %arg4[%7, %c0_4] : memref<128x128xbf16, #tpu.memory_space<vmem>>, vector<128x128xbf16>
    %cst = arith.constant dense<0.000000e+00> : vector<128x128xf32>
    %9 = tpu.matmul %6, %8, %cst {dimension_numbers = #tpu.dot_dimension_numbers<[1], [0], [0], [1], [0, 0, 1, 1], [], []>} : vector<128x128xbf16>, vector<128x128xbf16>, vector<128x128xf32> -> vector<128x128xf32>
    %10 = arith.addf %5, %9 : vector<128x128xf32>
    %c0_5 = arith.constant 0 : index
    %c0_6 = arith.constant 0 : index
    %11 = vector.load %arg7[%c0_5, %c0_6] : memref<128x128xf32, #tpu.memory_space<vmem>>, vector<128x128xf32>
    tpu.vector_store %arg7[%c0_5, %c0_6], %10 {strides = array<i32>} : memref<128x128xf32, #tpu.memory_space<vmem>>, vector<128x128xf32>,
    %c0_i32_7 = arith.constant 0 : i32
    %12 = arith.cmpi eq, %arg2, %c0_i32_7 : i32
    %13 = arith.extui %12 : i1 to i32
    %c0_i32_8 = arith.constant 0 : i32
    %14 = arith.cmpi ne, %13, %c0_i32_8 : i32
    scf.if %14 {
      %c0_9 = arith.constant 0 : index
      %c0_10 = arith.constant 0 : index
      %15 = vector.load %arg7[%c0_9, %c0_10] : memref<128x128xf32, #tpu.memory_space<vmem>>, vector<128x128xf32>
      %c0_11 = arith.constant 0 : index
      %c0_12 = arith.constant 0 : index
      %16 = vector.load %arg5[%c0_11, %c0_12] : memref<1x128xf32, #tpu.memory_space<vmem>>, vector<1x128xf32>
      %17 = vector.broadcast %16 : vector<1x128xf32> to vector<128x128xf32>
      %18 = arith.addf %15, %17 : vector<128x128xf32>
      %cst_13 = arith.constant 0.000000e+00 : f32
      %19 = vector.broadcast %cst_13 : f32 to vector<128x128xf32>
      %20 = arith.subf %19, %18 : vector<128x128xf32>
      %21 = math.exp %20 : vector<128x128xf32>
      %cst_14 = arith.constant 1.000000e+00 : f32
      %22 = vector.broadcast %cst_14 : f32 to vector<128x128xf32>
      %23 = arith.addf %22, %21 : vector<128x128xf32>
      %24 = tpu.reciprocal %23 {approx = true} : vector<128x128xf32> -> vector<128x128xf32>
      %cst_15 = arith.constant 0.000000e+00 : f32
      %cst_16 = arith.constant 1.000000e+00 : f32
      %25 = vector.broadcast %cst_15 : f32 to vector<128x128xf32>
      %26 = arith.maximumf %25, %24 : vector<128x128xf32>
      %27 = vector.broadcast %cst_16 : f32 to vector<128x128xf32>
      %28 = arith.minimumf %27, %26 : vector<128x128xf32>
      %c0_17 = arith.constant 0 : index
      %c0_18 = arith.constant 0 : index
      %29 = vector.load %arg6[%c0_17, %c0_18] : memref<128x128xf32, #tpu.memory_space<vmem>>, vector<128x128xf32>
      tpu.vector_store %arg6[%c0_17, %c0_18], %28 {strides = array<i32>} : memref<128x128xf32, #tpu.memory_space<vmem>>, vector<128x128xf32>,
    } else {
    }
    return
  }
  func.func @transform_0(%arg0: i32, %arg1: i32, %arg2: i32) -> (i32, i32) {
    %c0_i32 = arith.constant 0 : i32
    return %arg1, %arg2 : i32, i32
  }
  func.func @transform_1(%arg0: i32, %arg1: i32, %arg2: i32) -> (i32, i32) {
    %c0_i32 = arith.constant 0 : i32
    %c0_i32_0 = arith.constant 0 : i32
    return %c0_i32, %arg0 : i32, i32
  }
  func.func @transform_2(%arg0: i32, %arg1: i32, %arg2: i32) -> (i32, i32) {
    %c0_i32 = arith.constant 0 : i32
    %c0_i32_0 = arith.constant 0 : i32
    return %c0_i32, %arg0 : i32, i32
  }
  func.func @transform_3(%arg0: i32, %arg1: i32, %arg2: i32) -> (i32, i32) {
    %c0_i32 = arith.constant 0 : i32
    return %arg1, %arg0 : i32, i32
  }
}

</mosaic_0001>

<llo_original>
// kernel: conv_unet_forward.16
$region0: #{conv_unet_forward.16}
  #allocation0 [shape = 'u32[]', space=smem, size = 0x4, offset = 0x4, fixed_abs, tag = 'smem constant byte address 0x4 - core index']
  #allocation1 [shape = 'u32[144,128]{1,0:T(1,128)}', space=vmem, size = 0x12000, scoped, tag = 'internal scratch']
  %s0 = inlined_call_operand.vmem [shape: f32[16,128], index: 0, kind: input, shape index: {}]
  %s1 = inlined_call_operand.vmem [shape: f32[16,128], index: 1, kind: input, shape index: {}]
  %s2 = inlined_call_operand.vmem [shape: f32[16,128], index: 2, kind: output, shape index: {}]
  %s3 = sld [smem:[#allocation0]]
  $region18: #{conv_unet_forward.16} parent=0
    _
  %s5 = ssub.s32 1, %s3
  %s6 = scalar_select 0, %s5, %s3
  // Predicated region
  $region2: #{conv_unet_forward.16} parent=0 // pred_check
    _
  $region3: #{conv_unet_forward.16} parent=0 // pred_check_branch
    %8 = sbr.rel (0) target = $region5
  $region4: #{conv_unet_forward.16} parent=0 // pred_region
    _
  $region5: #{conv_unet_forward.16} parent=0 // pred_fallthru
    _
  // Predicated region
  $region6: #{conv_unet_forward.16} parent=0 // pred_check
    _
  $region7: #{conv_unet_forward.16} parent=0 // pred_check_branch
    %10 = sbr.rel (0) target = $region9
  $region8: #{conv_unet_forward.16} parent=0 // pred_region
    _
  $region9: #{conv_unet_forward.16} parent=0 // pred_fallthru
    _
  %v11 = vld [vmem:[%s0] sm:$0xff]
  %v12 = vld [vmem:[%s0 + $0x8] sm:$0xff]
  %v13 = vld [vmem:[%s1] sm:$0xff]
  %v14 = vld [vmem:[%s1 + $0x8] sm:$0xff]
  %v15 = vmul.f32 %v11, %v13
  %v16 = vmul.f32 %v12, %v14
  %17 = vst [vmem:[%s2] sm:$0xff] %v15
  %18 = vst [vmem:[%s2 + $0x8] sm:$0xff] %v16
  // Predicated region
  $region10: #{conv_unet_forward.16} parent=0 // pred_check
    _
  $region11: #{conv_unet_forward.16} parent=0 // pred_check_branch
    %20 = sbr.rel (0) target = $region13
  $region12: #{conv_unet_forward.16} parent=0 // pred_region
    _
  $region13: #{conv_unet_forward.16} parent=0 // pred_fallthru
    _
  // Predicated region
  $region14: #{conv_unet_forward.16} parent=0 // pred_check
    _
  $region15: #{conv_unet_forward.16} parent=0 // pred_check_branch
    %22 = sbr.rel (0) target = $region17
  $region16: #{conv_unet_forward.16} parent=0 // pred_region
    _
  $region17: #{conv_unet_forward.16} parent=0 // pred_fallthru
    _

// kernel: conv_unet_forward.17
$region0: #{conv_unet_forward.17}
  #allocation0 [shape = 'u32[]', space=smem, size = 0x4, offset = 0x4, fixed_abs, tag = 'smem constant byte address 0x4 - core index']
  #allocation1 [shape = 'u32[144,128]{1,0:T(1,128)}', space=vmem, size = 0x12000, scoped, tag = 'internal scratch']
  #allocation2 [shape = 'f32[128,128]{1,0:T(8,128)}', space=vmem, size = 0x10000, scoped, tag = 'scratch operand']
  %s0 = inlined_call_operand.vmem [shape: bf16[128,128], index: 0, kind: input, shape index: {}]
  %s1 = inlined_call_operand.vmem [shape: bf16[128,128], index: 1, kind: input, shape index: {}]
  %s2 = inlined_call_operand.vmem [shape: f32[1,128], index: 2, kind: input, shape index: {}]
  %s3 = inlined_call_operand.vmem [shape: f32[128,128], index: 3, kind: output, shape index: {}]
  %s4 = sld [smem:[#allocation0]]
  $region30: #{conv_unet_forward.17} parent=0
    _
  %s6 = ssub.s32 1, %s4
  %s7 = scalar_select 0, %s6, %s4
  // Predicated region
  $region2: #{conv_unet_forward.17} parent=0 // pred_check
    _
  $region3: #{conv_unet_forward.17} parent=0 // pred_check_branch
    %9 = sbr.rel (0) target = $region5
  $region4: #{conv_unet_forward.17} parent=0 // pred_region
    _
  $region5: #{conv_unet_forward.17} parent=0 // pred_fallthru
    _
  // Predicated region
  $region6: #{conv_unet_forward.17} parent=0 // pred_check
    _
  $region7: #{conv_unet_forward.17} parent=0 // pred_check_branch
    %11 = sbr.rel (0) target = $region9
  $region8: #{conv_unet_forward.17} parent=0 // pred_region
    _
  $region9: #{conv_unet_forward.17} parent=0 // pred_fallthru
    _
  // Predicated region
  $region10: #{conv_unet_forward.17} parent=0 // pred_check
    _
  $region11: #{conv_unet_forward.17} parent=0 // pred_check_branch
    %13 = sbr.rel (0) target = $region13
  $region12: #{conv_unet_forward.17} parent=0 // pred_region
    _
  $region13: #{conv_unet_forward.17} parent=0 // pred_fallthru
    _
  %p15 = scmp.eq.s32.totalorder 0, 0
  // Predicated region
  $region14: #{conv_unet_forward.17} parent=0 // pred_check
    %p16 = pneg %p15
  $region15: #{conv_unet_forward.17} parent=0 // pred_check_branch
    %18 = sbr.rel (%p16) target = $region17
  $region16: #{conv_unet_forward.17} parent=0 // pred_region
    %19 = vst [vmem:[#allocation2] sm:$0xff] 0.0
    %20 = vst [vmem:[#allocation2 + $0x8] sm:$0xff] 0.0
    %21 = vst [vmem:[#allocation2 + $0x10] sm:$0xff] 0.0
    %22 = vst [vmem:[#allocation2 + $0x18] sm:$0xff] 0.0
    %23 = vst [vmem:[#allocation2 + $0x20] sm:$0xff] 0.0
    %24 = vst [vmem:[#allocation2 + $0x28] sm:$0xff] 0.0
    %25 = vst [vmem:[#allocation2 + $0x30] sm:$0xff] 0.0
    %26 = vst [vmem:[#allocation2 + $0x38] sm:$0xff] 0.0
    %27 = vst [vmem:[#allocation2 + $0x40] sm:$0xff] 0.0
    %28 = vst [vmem:[#allocation2 + $0x48] sm:$0xff] 0.0
    %29 = vst [vmem:[#allocation2 + $0x50] sm:$0xff] 0.0
    %30 = vst [vmem:[#allocation2 + $0x58] sm:$0xff] 0.0
    %31 = vst [vmem:[#allocation2 + $0x60] sm:$0xff] 0.0
    %32 = vst [vmem:[#allocation2 + $0x68] sm:$0xff] 0.0
    %33 = vst [vmem:[#allocation2 + $0x70] sm:$0xff] 0.0
    %34 = vst [vmem:[#allocation2 + $0x78] sm:$0xff] 0.0
  $region17: #{conv_unet_forward.17} parent=0 // pred_fallthru
    _
  %s35 = smul.u32 0, 128
  %v36 = vld [vmem:[#allocation2] sm:$0xff]
  %v37 = vld [vmem:[#allocation2 + $0x8] sm:$0xff]
  %v38 = vld [vmem:[#allocation2 + $0x10] sm:$0xff]
  %v39 = vld [vmem:[#allocation2 + $0x18] sm:$0xff]
  %v40 = vld [vmem:[#allocation2 + $0x20] sm:$0xff]
  %v41 = vld [vmem:[#allocation2 + $0x28] sm:$0xff]
  %v42 = vld [vmem:[#allocation2 + $0x30] sm:$0xff]
  %v43 = vld [vmem:[#allocation2 + $0x38] sm:$0xff]
  %v44 = vld [vmem:[#allocation2 + $0x40] sm:$0xff]
  %v45 = vld [vmem:[#allocation2 + $0x48] sm:$0xff]
  %v46 = vld [vmem:[#allocation2 + $0x50] sm:$0xff]
  %v47 = vld [vmem:[#allocation2 + $0x58] sm:$0xff]
  %v48 = vld [vmem:[#allocation2 + $0x60] sm:$0xff]
  %v49 = vld [vmem:[#allocation2 + $0x68] sm:$0xff]
  %v50 = vld [vmem:[#allocation2 + $0x70] sm:$0xff]
  %v51 = vld [vmem:[#allocation2 + $0x78] sm:$0xff]
  %v52 = vld [vmem:[%s0] sm:$0xf]
  %v53 = vld [vmem:[%s0 + $0x4] sm:$0xf]
  %v54 = vld [vmem:[%s0 + $0x8] sm:$0xf]
  %v55 = vld [vmem:[%s0 + $0xc] sm:$0xf]
  %v56 = vld [vmem:[%s0 + $0x10] sm:$0xf]
  %v57 = vld [vmem:[%s0 + $0x14] sm:$0xf]
  %v58 = vld [vmem:[%s0 + $0x18] sm:$0xf]
  %v59 = vld [vmem:[%s0 + $0x1c] sm:$0xf]
  %v60 = vld [vmem:[%s0 + $0x20] sm:$0xf]
  %v61 = vld [vmem:[%s0 + $0x24] sm:$0xf]
  %v62 = vld [vmem:[%s0 + $0x28] sm:$0xf]
  %v63 = vld [vmem:[%s0 + $0x2c] sm:$0xf]
  %v64 = vld [vmem:[%s0 + $0x30] sm:$0xf]
  %v65 = vld [vmem:[%s0 + $0x34] sm:$0xf]
  %v66 = vld [vmem:[%s0 + $0x38] sm:$0xf]
  %v67 = vld [vmem:[%s0 + $0x3c] sm:$0xf]
  %s68 = sshra.s32 %s35, 3
  %s69 = sand.u32 %s35, 7
  %s70 = smul.addr %s68, 4
  %s71 = scalar_lea.vmem %s1, %s70
  %v72 = vld [vmem:[%s71] sm:$0xf]
  %v73 = vld [vmem:[%s71 + $0x4] sm:$0xf]
  %v74 = vld [vmem:[%s71 + $0x8] sm:$0xf]
  %v75 = vld [vmem:[%s71 + $0xc] sm:$0xf]
  %v76 = vld [vmem:[%s71 + $0x10] sm:$0xf]
  %v77 = vld [vmem:[%s71 + $0x14] sm:$0xf]
  %v78 = vld [vmem:[%s71 + $0x18] sm:$0xf]
  %v79 = vld [vmem:[%s71 + $0x1c] sm:$0xf]
  %v80 = vld [vmem:[%s71 + $0x20] sm:$0xf]
  %v81 = vld [vmem:[%s71 + $0x24] sm:$0xf]
  %v82 = vld [vmem:[%s71 + $0x28] sm:$0xf]
  %v83 = vld [vmem:[%s71 + $0x2c] sm:$0xf]
  %v84 = vld [vmem:[%s71 + $0x30] sm:$0xf]
  %v85 = vld [vmem:[%s71 + $0x34] sm:$0xf]
  %v86 = vld [vmem:[%s71 + $0x38] sm:$0xf]
  %v87 = vld [vmem:[%s71 + $0x3c] sm:$0xf]
  %v104 = vunpack.c.l.b16 %v52
  %v105 = vunpack.c.l.b16 %v53
  %v106 = vunpack.c.l.b16 %v54
  %v107 = vunpack.c.l.b16 %v55
  %v108 = vunpack.c.l.b16 %v56
  %v109 = vunpack.c.l.b16 %v57
  %v110 = vunpack.c.l.b16 %v58
  %v111 = vunpack.c.l.b16 %v59
  %v112 = vunpack.c.l.b16 %v60
  %v113 = vunpack.c.l.b16 %v61
  %v114 = vunpack.c.l.b16 %v62
  %v115 = vunpack.c.l.b16 %v63
  %v116 = vunpack.c.l.b16 %v64
  %v117 = vunpack.c.l.b16 %v65
  %v118 = vunpack.c.l.b16 %v66
  %v119 = vunpack.c.l.b16 %v67
  %v120 = vpack.c.b16 %v105, %v104
  %v121 = vpack.c.b16 %v107, %v106
  %v122 = vpack.c.b16 %v109, %v108
  %v123 = vpack.c.b16 %v111, %v110
  %v124 = vpack.c.b16 %v113, %v112
  %v125 = vpack.c.b16 %v115, %v114
  %v126 = vpack.c.b16 %v117, %v116
  %v127 = vpack.c.b16 %v119, %v118
  %v152 = vunpack.c.l.b16 %v72
  %v153 = vunpack.c.l.b16 %v73
  %v154 = vunpack.c.l.b16 %v74
  %v155 = vunpack.c.l.b16 %v75
  %v156 = vunpack.c.l.b16 %v76
  %v157 = vunpack.c.l.b16 %v77
  %v158 = vunpack.c.l.b16 %v78
  %v159 = vunpack.c.l.b16 %v79
  %v160 = vunpack.c.l.b16 %v80
  %v161 = vunpack.c.l.b16 %v81
  %v162 = vunpack.c.l.b16 %v82
  %v163 = vunpack.c.l.b16 %v83
  %v164 = vunpack.c.l.b16 %v84
  %v165 = vunpack.c.l.b16 %v85
  %v166 = vunpack.c.l.b16 %v86
  %v167 = vunpack.c.l.b16 %v87
  %v168 = vpack.c.b16 %v153, %v152
  %v169 = vpack.c.b16 %v155, %v154
  %v170 = vpack.c.b16 %v157, %v156
  %v171 = vpack.c.b16 %v159, %v158
  %v172 = vpack.c.b16 %v161, %v160
  %v173 = vpack.c.b16 %v163, %v162
  %v174 = vpack.c.b16 %v165, %v164
  %v175 = vpack.c.b16 %v167, %v166
  %184 = vmatprep.subr.bf16.mxu0 0
  %185 = vmatpush1.bf16.msra.mxu0 %v175
  %186 = vmatprep.subr.bf16.mxu0 0
  %187 = vmatpush1.bf16.msra.mxu0 %v174
  %188 = vmatprep.subr.bf16.mxu0 0
  %189 = vmatpush1.bf16.msra.mxu0 %v173
  %190 = vmatprep.subr.bf16.mxu0 0
  %191 = vmatpush1.bf16.msra.mxu0 %v172
  %192 = vmatprep.subr.bf16.mxu0 0
  %193 = vmatpush1.bf16.msra.mxu0 %v171
  %194 = vmatprep.subr.bf16.mxu0 0
  %195 = vmatpush1.bf16.msra.mxu0 %v170
  %196 = vmatprep.subr.bf16.mxu0 0
  %197 = vmatpush1.bf16.msra.mxu0 %v169
  %198 = vmatprep.subr.bf16.mxu0 0
  %199 = vmatpush1.bf16.msra.mxu0 %v168
  %200 = vmatprep.subr.bf16.mxu0 0
  %201 = vmatpush2.bf16.msra.mxu0 0
  %202 = vmatprep.subr.bf16.mxu0 0
  %203 = vmatpush2.bf16.msra.mxu0 0
  %204 = vmatprep.subr.bf16.mxu0 0
  %205 = vmatpush2.bf16.msra.mxu0 0
  %206 = vmatprep.subr.bf16.mxu0 0
  %207 = vmatpush2.bf16.msra.mxu0 0
  %208 = vmatprep.subr.bf16.mxu0 0
  %209 = vmatpush2.bf16.msra.mxu0 0
  %210 = vmatprep.subr.bf16.mxu0 0
  %211 = vmatpush2.bf16.msra.mxu0 0
  %212 = vmatprep.subr.bf16.mxu0 0
  %213 = vmatpush2.bf16.msra.mxu0 0
  %214 = vmatprep.subr.bf16.mxu0 0
  %215 = vmatpush2.bf16.msra.mxu0 0
  %216 = vmatprep.mubr.bf16.mxu0 0
  %217 = vmatmul.mubr.bf16.gmra.mxu0 %v120
  %v218 = vpop.f32.mrf.mxu0
  %v219 = vadd.f32 0.0, %v218
  %v220 = vpop.f32.mrf.mxu0
  %v221 = vpop.f32.mrf.mxu0
  %v222 = vadd.f32 0.0, %v221
  %v223 = vpop.f32.mrf.mxu0
  %224 = vmatprep.mubr.bf16.mxu0 0
  %225 = vmatmul.mubr.bf16.gmra.mxu0 %v121
  %v226 = vpop.f32.mrf.mxu0
  %v227 = vadd.f32 0.0, %v226
  %v228 = vpop.f32.mrf.mxu0
  %v229 = vpop.f32.mrf.mxu0
  %v230 = vadd.f32 0.0, %v229
  %v231 = vpop.f32.mrf.mxu0
  %232 = vmatprep.mubr.bf16.mxu0 0
  %233 = vmatmul.mubr.bf16.gmra.mxu0 %v122
  %v234 = vpop.f32.mrf.mxu0
  %v235 = vadd.f32 0.0, %v234
  %v236 = vpop.f32.mrf.mxu0
  %v237 = vpop.f32.mrf.mxu0
  %v238 = vadd.f32 0.0, %v237
  %v239 = vpop.f32.mrf.mxu0
  %240 = vmatprep.mubr.bf16.mxu0 0
  %241 = vmatmul.mubr.bf16.gmra.mxu0 %v123
  %v242 = vpop.f32.mrf.mxu0
  %v243 = vadd.f32 0.0, %v242
  %v244 = vpop.f32.mrf.mxu0
  %v245 = vpop.f32.mrf.mxu0
  %v246 = vadd.f32 0.0, %v245
  %v247 = vpop.f32.mrf.mxu0
  %248 = vmatprep.mubr.bf16.mxu0 0
  %249 = vmatmul.mubr.bf16.gmra.mxu0 %v124
  %v250 = vpop.f32.mrf.mxu0
  %v251 = vadd.f32 0.0, %v250
  %v252 = vpop.f32.mrf.mxu0
  %v253 = vpop.f32.mrf.mxu0
  %v254 = vadd.f32 0.0, %v253
  %v255 = vpop.f32.mrf.mxu0
  %256 = vmatprep.mubr.bf16.mxu0 0
  %257 = vmatmul.mubr.bf16.gmra.mxu0 %v125
  %v258 = vpop.f32.mrf.mxu0
  %v259 = vadd.f32 0.0, %v258
  %v260 = vpop.f32.mrf.mxu0
  %v261 = vpop.f32.mrf.mxu0
  %v262 = vadd.f32 0.0, %v261
  %v263 = vpop.f32.mrf.mxu0
  %264 = vmatprep.mubr.bf16.mxu0 0
  %265 = vmatmul.mubr.bf16.gmra.mxu0 %v126
  %v266 = vpop.f32.mrf.mxu0
  %v267 = vadd.f32 0.0, %v266
  %v268 = vpop.f32.mrf.mxu0
  %v269 = vpop.f32.mrf.mxu0
  %v270 = vadd.f32 0.0, %v269
  %v271 = vpop.f32.mrf.mxu0
  %272 = vmatprep.mubr.bf16.mxu0 0
  %273 = vmatmul.mubr.bf16.gmra.mxu0 %v127
  %v274 = vpop.f32.mrf.mxu0
  %v275 = vadd.f32 0.0, %v274
  %v276 = vpop.f32.mrf.mxu0
  %v277 = vpop.f32.mrf.mxu0
  %v278 = vadd.f32 0.0, %v277
  %v279 = vpop.f32.mrf.mxu0
  %280 = vdwg.mxu0
  %v281 = vadd.f32 %v36, %v219
  %v282 = vadd.f32 %v37, %v222
  %v283 = vadd.f32 %v38, %v227
  %v284 = vadd.f32 %v39, %v230
  %v285 = vadd.f32 %v40, %v235
  %v286 = vadd.f32 %v41, %v238
  %v287 = vadd.f32 %v42, %v243
  %v288 = vadd.f32 %v43, %v246
  %v289 = vadd.f32 %v44, %v251
  %v290 = vadd.f32 %v45, %v254
  %v291 = vadd.f32 %v46, %v259
  %v292 = vadd.f32 %v47, %v262
  %v293 = vadd.f32 %v48, %v267
  %v294 = vadd.f32 %v49, %v270
  %v295 = vadd.f32 %v50, %v275
  %v296 = vadd.f32 %v51, %v278
  %297 = vst [vmem:[#allocation2] sm:$0xff] %v281
  %298 = vst [vmem:[#allocation2 + $0x8] sm:$0xff] %v282
  %299 = vst [vmem:[#allocation2 + $0x10] sm:$0xff] %v283
  %300 = vst [vmem:[#allocation2 + $0x18] sm:$0xff] %v284
  %301 = vst [vmem:[#allocation2 + $0x20] sm:$0xff] %v285
  %302 = vst [vmem:[#allocation2 + $0x28] sm:$0xff] %v286
  %303 = vst [vmem:[#allocation2 + $0x30] sm:$0xff] %v287
  %304 = vst [vmem:[#allocation2 + $0x38] sm:$0xff] %v288
  %305 = vst [vmem:[#allocation2 + $0x40] sm:$0xff] %v289
  %306 = vst [vmem:[#allocation2 + $0x48] sm:$0xff] %v290
  %307 = vst [vmem:[#allocation2 + $0x50] sm:$0xff] %v291
  %308 = vst [vmem:[#allocation2 + $0x58] sm:$0xff] %v292
  %309 = vst [vmem:[#allocation2 + $0x60] sm:$0xff] %v293
  %310 = vst [vmem:[#allocation2 + $0x68] sm:$0xff] %v294
  %311 = vst [vmem:[#allocation2 + $0x70] sm:$0xff] %v295
  %312 = vst [vmem:[#allocation2 + $0x78] sm:$0xff] %v296
  // Predicated region
  $region18: #{conv_unet_forward.17} parent=0 // pred_check
    %p313 = pneg %p15
  $region19: #{conv_unet_forward.17} parent=0 // pred_check_branch
    %315 = sbr.rel (%p313) target = $region21
  $region20: #{conv_unet_forward.17} parent=0 // pred_region
    %v316 = vld [vmem:[#allocation2] sm:$0xff]
    %v317 = vld [vmem:[#allocation2 + $0x8] sm:$0xff]
    %v318 = vld [vmem:[#allocation2 + $0x10] sm:$0xff]
    %v319 = vld [vmem:[#allocation2 + $0x18] sm:$0xff]
    %v320 = vld [vmem:[#allocation2 + $0x20] sm:$0xff]
    %v321 = vld [vmem:[#allocation2 + $0x28] sm:$0xff]
    %v322 = vld [vmem:[#allocation2 + $0x30] sm:$0xff]
    %v323 = vld [vmem:[#allocation2 + $0x38] sm:$0xff]
    %v324 = vld [vmem:[#allocation2 + $0x40] sm:$0xff]
    %v325 = vld [vmem:[#allocation2 + $0x48] sm:$0xff]
    %v326 = vld [vmem:[#allocation2 + $0x50] sm:$0xff]
    %v327 = vld [vmem:[#allocation2 + $0x58] sm:$0xff]
    %v328 = vld [vmem:[#allocation2 + $0x60] sm:$0xff]
    %v329 = vld [vmem:[#allocation2 + $0x68] sm:$0xff]
    %v330 = vld [vmem:[#allocation2 + $0x70] sm:$0xff]
    %v331 = vld [vmem:[#allocation2 + $0x78] sm:$0xff]
    %v332 = vld [vmem:[%s2] sm:$0x1]
    %v334 = vlaneseq
    %v335 = vshrl.u32 %v334, 7
    %v336 = vsub.s32 0, %v335
    %v337 = vrot.slane %v332, %v336
    %v339 = vadd.f32 %v316, %v337
    %v340 = vadd.f32 %v317, %v337
    %v341 = vadd.f32 %v318, %v337
    %v342 = vadd.f32 %v319, %v337
    %v343 = vadd.f32 %v320, %v337
    %v344 = vadd.f32 %v321, %v337
    %v345 = vadd.f32 %v322, %v337
    %v346 = vadd.f32 %v323, %v337
    %v347 = vadd.f32 %v324, %v337
    %v348 = vadd.f32 %v325, %v337
    %v349 = vadd.f32 %v326, %v337
    %v350 = vadd.f32 %v327, %v337
    %v351 = vadd.f32 %v328, %v337
    %v352 = vadd.f32 %v329, %v337
    %v353 = vadd.f32 %v330, %v337
    %v354 = vadd.f32 %v331, %v337
    %v355 = vmax.f32 %v339, 0.0
    %v356 = vmax.f32 %v340, 0.0
    %v357 = vmax.f32 %v341, 0.0
    %v358 = vmax.f32 %v342, 0.0
    %v359 = vmax.f32 %v343, 0.0
    %v360 = vmax.f32 %v344, 0.0
    %v361 = vmax.f32 %v345, 0.0
    %v362 = vmax.f32 %v346, 0.0
    %v363 = vmax.f32 %v347, 0.0
    %v364 = vmax.f32 %v348, 0.0
    %v365 = vmax.f32 %v349, 0.0
    %v366 = vmax.f32 %v350, 0.0
    %v367 = vmax.f32 %v351, 0.0
    %v368 = vmax.f32 %v352, 0.0
    %v369 = vmax.f32 %v353, 0.0
    %v370 = vmax.f32 %v354, 0.0
    %371 = vst [vmem:[%s3] sm:$0xff] %v355
    %372 = vst [vmem:[%s3 + $0x8] sm:$0xff] %v356
    %373 = vst [vmem:[%s3 + $0x10] sm:$0xff] %v357
    %374 = vst [vmem:[%s3 + $0x18] sm:$0xff] %v358
    %375 = vst [vmem:[%s3 + $0x20] sm:$0xff] %v359
    %376 = vst [vmem:[%s3 + $0x28] sm:$0xff] %v360
    %377 = vst [vmem:[%s3 + $0x30] sm:$0xff] %v361
    %378 = vst [vmem:[%s3 + $0x38] sm:$0xff] %v362
    %379 = vst [vmem:[%s3 + $0x40] sm:$0xff] %v363
    %380 = vst [vmem:[%s3 + $0x48] sm:$0xff] %v364
    %381 = vst [vmem:[%s3 + $0x50] sm:$0xff] %v365
    %382 = vst [vmem:[%s3 + $0x58] sm:$0xff] %v366
    %383 = vst [vmem:[%s3 + $0x60] sm:$0xff] %v367
    %384 = vst [vmem:[%s3 + $0x68] sm:$0xff] %v368
    %385 = vst [vmem:[%s3 + $0x70] sm:$0xff] %v369
    %386 = vst [vmem:[%s3 + $0x78] sm:$0xff] %v370
  $region21: #{conv_unet_forward.17} parent=0 // pred_fallthru
    _
  // Predicated region
  $region22: #{conv_unet_forward.17} parent=0 // pred_check
    _
  $region23: #{conv_unet_forward.17} parent=0 // pred_check_branch
    %388 = sbr.rel (0) target = $region25
  $region24: #{conv_unet_forward.17} parent=0 // pred_region
    _
  $region25: #{conv_unet_forward.17} parent=0 // pred_fallthru
    _
  // Predicated region
  $region26: #{conv_unet_forward.17} parent=0 // pred_check
    _
  $region27: #{conv_unet_forward.17} parent=0 // pred_check_branch
    %390 = sbr.rel (0) target = $region29
  $region28: #{conv_unet_forward.17} parent=0 // pred_region
    _
  $region29: #{conv_unet_forward.17} parent=0 // pred_fallthru
    _

// kernel: conv_unet_forward.18
$region0: #{conv_unet_forward.18}
  #allocation0 [shape = 'u32[]', space=smem, size = 0x4, offset = 0x4, fixed_abs, tag = 'smem constant byte address 0x4 - core index']
  #allocation1 [shape = 'u32[144,128]{1,0:T(1,128)}', space=vmem, size = 0x12000, scoped, tag = 'internal scratch']
  #allocation2 [shape = 'f32[32,128]{1,0:T(8,128)}', space=vmem, size = 0x4000, scoped, tag = 'scratch operand']
  %s0 = inlined_call_operand.vmem [shape: bf16[32,256], index: 0, kind: input, shape index: {}]
  %s1 = inlined_call_operand.vmem [shape: bf16[256,128], index: 1, kind: input, shape index: {}]
  %s2 = inlined_call_operand.vmem [shape: f32[1,128], index: 2, kind: input, shape index: {}]
  %s3 = inlined_call_operand.vmem [shape: f32[32,128], index: 3, kind: output, shape index: {}]
  %s4 = sld [smem:[#allocation0]]
  $region30: #{conv_unet_forward.18} parent=0
    _
  %s6 = ssub.s32 1, %s4
  %s7 = scalar_select 0, %s6, %s4
  // Predicated region
  $region2: #{conv_unet_forward.18} parent=0 // pred_check
    _
  $region3: #{conv_unet_forward.18} parent=0 // pred_check_branch
    %9 = sbr.rel (0) target = $region5
  $region4: #{conv_unet_forward.18} parent=0 // pred_region
    _
  $region5: #{conv_unet_forward.18} parent=0 // pred_fallthru
    _
  // Predicated region
  $region6: #{conv_unet_forward.18} parent=0 // pred_check
    _
  $region7: #{conv_unet_forward.18} parent=0 // pred_check_branch
    %11 = sbr.rel (0) target = $region9
  $region8: #{conv_unet_forward.18} parent=0 // pred_region
    _
  $region9: #{conv_unet_forward.18} parent=0 // pred_fallthru
    _
  // Predicated region
  $region10: #{conv_unet_forward.18} parent=0 // pred_check
    _
  $region11: #{conv_unet_forward.18} parent=0 // pred_check_branch
    %13 = sbr.rel (0) target = $region13
  $region12: #{conv_unet_forward.18} parent=0 // pred_region
    _
  $region13: #{conv_unet_forward.18} parent=0 // pred_fallthru
    _
  %p15 = scmp.eq.s32.totalorder 0, 0
  // Predicated region
  $region14: #{conv_unet_forward.18} parent=0 // pred_check
    %p16 = pneg %p15
  $region15: #{conv_unet_forward.18} parent=0 // pred_check_branch
    %18 = sbr.rel (%p16) target = $region17
  $region16: #{conv_unet_forward.18} parent=0 // pred_region
    %19 = vst [vmem:[#allocation2] sm:$0xff] 0.0
    %20 = vst [vmem:[#allocation2 + $0x8] sm:$0xff] 0.0
    %21 = vst [vmem:[#allocation2 + $0x10] sm:$0xff] 0.0
    %22 = vst [vmem:[#allocation2 + $0x18] sm:$0xff] 0.0
  $region17: #{conv_unet_forward.18} parent=0 // pred_fallthru
    _
  %s23 = smul.u32 0, 256
  %v24 = vld [vmem:[#allocation2] sm:$0xff]
  %v25 = vld [vmem:[#allocation2 + $0x8] sm:$0xff]
  %v26 = vld [vmem:[#allocation2 + $0x10] sm:$0xff]
  %v27 = vld [vmem:[#allocation2 + $0x18] sm:$0xff]
  %v28 = vld [vmem:[%s0] sm:$0xff]
  %v29 = vld [vmem:[%s0 + $0x8] sm:$0xff]
  %v30 = vld [vmem:[%s0 + $0x10] sm:$0xff]
  %v31 = vld [vmem:[%s0 + $0x18] sm:$0xff]
  %s32 = sshra.s32 %s23, 3
  %s33 = sand.u32 %s23, 7
  %s34 = smul.addr %s32, 4
  %s35 = scalar_lea.vmem %s1, %s34
  %v36 = vld [vmem:[%s35] sm:$0xf]
  %v37 = vld [vmem:[%s35 + $0x4] sm:$0xf]
  %v38 = vld [vmem:[%s35 + $0x8] sm:$0xf]
  %v39 = vld [vmem:[%s35 + $0xc] sm:$0xf]
  %v40 = vld [vmem:[%s35 + $0x10] sm:$0xf]
  %v41 = vld [vmem:[%s35 + $0x14] sm:$0xf]
  %v42 = vld [vmem:[%s35 + $0x18] sm:$0xf]
  %v43 = vld [vmem:[%s35 + $0x1c] sm:$0xf]
  %v44 = vld [vmem:[%s35 + $0x20] sm:$0xf]
  %v45 = vld [vmem:[%s35 + $0x24] sm:$0xf]
  %v46 = vld [vmem:[%s35 + $0x28] sm:$0xf]
  %v47 = vld [vmem:[%s35 + $0x2c] sm:$0xf]
  %v48 = vld [vmem:[%s35 + $0x30] sm:$0xf]
  %v49 = vld [vmem:[%s35 + $0x34] sm:$0xf]
  %v50 = vld [vmem:[%s35 + $0x38] sm:$0xf]
  %v51 = vld [vmem:[%s35 + $0x3c] sm:$0xf]
  %v52 = vld [vmem:[%s35 + $0x40] sm:$0xf]
  %v53 = vld [vmem:[%s35 + $0x44] sm:$0xf]
  %v54 = vld [vmem:[%s35 + $0x48] sm:$0xf]
  %v55 = vld [vmem:[%s35 + $0x4c] sm:$0xf]
  %v56 = vld [vmem:[%s35 + $0x50] sm:$0xf]
  %v57 = vld [vmem:[%s35 + $0x54] sm:$0xf]
  %v58 = vld [vmem:[%s35 + $0x58] sm:$0xf]
  %v59 = vld [vmem:[%s35 + $0x5c] sm:$0xf]
  %v60 = vld [vmem:[%s35 + $0x60] sm:$0xf]
  %v61 = vld [vmem:[%s35 + $0x64] sm:$0xf]
  %v62 = vld [vmem:[%s35 + $0x68] sm:$0xf]
  %v63 = vld [vmem:[%s35 + $0x6c] sm:$0xf]
  %v64 = vld [vmem:[%s35 + $0x70] sm:$0xf]
  %v65 = vld [vmem:[%s35 + $0x74] sm:$0xf]
  %v66 = vld [vmem:[%s35 + $0x78] sm:$0xf]
  %v67 = vld [vmem:[%s35 + $0x7c] sm:$0xf]
  %v72 = vunpack.c.l.b16 %v28
  %v73 = vunpack.c.h.b16 %v28
  %v74 = vunpack.c.l.b16 %v29
  %v75 = vunpack.c.h.b16 %v29
  %v76 = vunpack.c.l.b16 %v30
  %v77 = vunpack.c.h.b16 %v30
  %v78 = vunpack.c.l.b16 %v31
  %v79 = vunpack.c.h.b16 %v31
  %v80 = vpack.c.b16 %v74, %v72
  %v81 = vpack.c.b16 %v75, %v73
  %v82 = vpack.c.b16 %v78, %v76
  %v83 = vpack.c.b16 %v79, %v77
  %v120 = vunpack.c.l.b16 %v36
  %v121 = vunpack.c.l.b16 %v37
  %v122 = vunpack.c.l.b16 %v38
  %v123 = vunpack.c.l.b16 %v39
  %v124 = vunpack.c.l.b16 %v40
  %v125 = vunpack.c.l.b16 %v41
  %v126 = vunpack.c.l.b16 %v42
  %v127 = vunpack.c.l.b16 %v43
  %v128 = vunpack.c.l.b16 %v44
  %v129 = vunpack.c.l.b16 %v45
  %v130 = vunpack.c.l.b16 %v46
  %v131 = vunpack.c.l.b16 %v47
  %v132 = vunpack.c.l.b16 %v48
  %v133 = vunpack.c.l.b16 %v49
  %v134 = vunpack.c.l.b16 %v50
  %v135 = vunpack.c.l.b16 %v51
  %v136 = vunpack.c.l.b16 %v52
  %v137 = vunpack.c.l.b16 %v53
  %v138 = vunpack.c.l.b16 %v54
  %v139 = vunpack.c.l.b16 %v55
  %v140 = vunpack.c.l.b16 %v56
  %v141 = vunpack.c.l.b16 %v57
  %v142 = vunpack.c.l.b16 %v58
  %v143 = vunpack.c.l.b16 %v59
  %v144 = vunpack.c.l.b16 %v60
  %v145 = vunpack.c.l.b16 %v61
  %v146 = vunpack.c.l.b16 %v62
  %v147 = vunpack.c.l.b16 %v63
  %v148 = vunpack.c.l.b16 %v64
  %v149 = vunpack.c.l.b16 %v65
  %v150 = vunpack.c.l.b16 %v66
  %v151 = vunpack.c.l.b16 %v67
  %v152 = vpack.c.b16 %v121, %v120
  %v153 = vpack.c.b16 %v123, %v122
  %v154 = vpack.c.b16 %v125, %v124
  %v155 = vpack.c.b16 %v127, %v126
  %v156 = vpack.c.b16 %v129, %v128
  %v157 = vpack.c.b16 %v131, %v130
  %v158 = vpack.c.b16 %v133, %v132
  %v159 = vpack.c.b16 %v135, %v134
  %v160 = vpack.c.b16 %v137, %v136
  %v161 = vpack.c.b16 %v139, %v138
  %v162 = vpack.c.b16 %v141, %v140
  %v163 = vpack.c.b16 %v143, %v142
  %v164 = vpack.c.b16 %v145, %v144
  %v165 = vpack.c.b16 %v147, %v146
  %v166 = vpack.c.b16 %v149, %v148
  %v167 = vpack.c.b16 %v151, %v150
  %184 = vmatprep.subr.bf16.mxu0 0
  %185 = vmatpush1.bf16.msra.mxu0 %v159
  %186 = vmatprep.subr.bf16.mxu0 0
  %187 = vmatpush1.bf16.msra.mxu0 %v158
  %188 = vmatprep.subr.bf16.mxu0 0
  %189 = vmatpush1.bf16.msra.mxu0 %v157
  %190 = vmatprep.subr.bf16.mxu0 0
  %191 = vmatpush1.bf16.msra.mxu0 %v156
  %192 = vmatprep.subr.bf16.mxu0 0
  %193 = vmatpush1.bf16.msra.mxu0 %v155
  %194 = vmatprep.subr.bf16.mxu0 0
  %195 = vmatpush1.bf16.msra.mxu0 %v154
  %196 = vmatprep.subr.bf16.mxu0 0
  %197 = vmatpush1.bf16.msra.mxu0 %v153
  %198 = vmatprep.subr.bf16.mxu0 0
  %199 = vmatpush1.bf16.msra.mxu0 %v152
  %200 = vmatprep.subr.bf16.mxu0 0
  %201 = vmatpush2.bf16.msra.mxu0 %v167
  %202 = vmatprep.subr.bf16.mxu0 0
  %203 = vmatpush2.bf16.msra.mxu0 %v166
  %204 = vmatprep.subr.bf16.mxu0 0
  %205 = vmatpush2.bf16.msra.mxu0 %v165
  %206 = vmatprep.subr.bf16.mxu0 0
  %207 = vmatpush2.bf16.msra.mxu0 %v164
  %208 = vmatprep.subr.bf16.mxu0 0
  %209 = vmatpush2.bf16.msra.mxu0 %v163
  %210 = vmatprep.subr.bf16.mxu0 0
  %211 = vmatpush2.bf16.msra.mxu0 %v162
  %212 = vmatprep.subr.bf16.mxu0 0
  %213 = vmatpush2.bf16.msra.mxu0 %v161
  %214 = vmatprep.subr.bf16.mxu0 0
  %215 = vmatpush2.bf16.msra.mxu0 %v160
  %216 = vmatprep.mubr.bf16.mxu0 %v81
  %217 = vmatmul.mubr.bf16.gmra.mxu0 %v80
  %v218 = vpop.f32.mrf.mxu0
  %v219 = vadd.f32 0.0, %v218
  %v220 = vpop.f32.mrf.mxu0
  %v221 = vpop.f32.mrf.mxu0
  %v222 = vadd.f32 0.0, %v221
  %v223 = vpop.f32.mrf.mxu0
  %224 = vmatprep.mubr.bf16.mxu0 %v83
  %225 = vmatmul.mubr.bf16.gmra.mxu0 %v82
  %v226 = vpop.f32.mrf.mxu0
  %v227 = vadd.f32 0.0, %v226
  %v228 = vpop.f32.mrf.mxu0
  %v229 = vpop.f32.mrf.mxu0
  %v230 = vadd.f32 0.0, %v229
  %v231 = vpop.f32.mrf.mxu0
  %232 = vdwg.mxu0
  %v233 = vadd.f32 %v24, %v219
  %v234 = vadd.f32 %v25, %v222
  %v235 = vadd.f32 %v26, %v227
  %v236 = vadd.f32 %v27, %v230
  %237 = vst [vmem:[#allocation2] sm:$0xff] %v233
  %238 = vst [vmem:[#allocation2 + $0x8] sm:$0xff] %v234
  %239 = vst [vmem:[#allocation2 + $0x10] sm:$0xff] %v235
  %240 = vst [vmem:[#allocation2 + $0x18] sm:$0xff] %v236
  // Predicated region
  $region18: #{conv_unet_forward.18} parent=0 // pred_check
    %p241 = pneg %p15
  $region19: #{conv_unet_forward.18} parent=0 // pred_check_branch
    %243 = sbr.rel (%p241) target = $region21
  $region20: #{conv_unet_forward.18} parent=0 // pred_region
    %v244 = vld [vmem:[#allocation2] sm:$0xff]
    %v245 = vld [vmem:[#allocation2 + $0x8] sm:$0xff]
    %v246 = vld [vmem:[#allocation2 + $0x10] sm:$0xff]
    %v247 = vld [vmem:[#allocation2 + $0x18] sm:$0xff]
    %v248 = vld [vmem:[%s2] sm:$0x1]
    %v250 = vlaneseq
    %v251 = vshrl.u32 %v250, 7
    %v252 = vsub.s32 0, %v251
    %v253 = vrot.slane %v248, %v252
    %v255 = vadd.f32 %v244, %v253
    %v256 = vadd.f32 %v245, %v253
    %v257 = vadd.f32 %v246, %v253
    %v258 = vadd.f32 %v247, %v253
    %v259 = vmax.f32 %v255, 0.0
    %v260 = vmax.f32 %v256, 0.0
    %v261 = vmax.f32 %v257, 0.0
    %v262 = vmax.f32 %v258, 0.0
    %263 = vst [vmem:[%s3] sm:$0xff] %v259
    %264 = vst [vmem:[%s3 + $0x8] sm:$0xff] %v260
    %265 = vst [vmem:[%s3 + $0x10] sm:$0xff] %v261
    %266 = vst [vmem:[%s3 + $0x18] sm:$0xff] %v262
  $region21: #{conv_unet_forward.18} parent=0 // pred_fallthru
    _
  // Predicated region
  $region22: #{conv_unet_forward.18} parent=0 // pred_check
    _
  $region23: #{conv_unet_forward.18} parent=0 // pred_check_branch
    %268 = sbr.rel (0) target = $region25
  $region24: #{conv_unet_forward.18} parent=0 // pred_region
    _
  $region25: #{conv_unet_forward.18} parent=0 // pred_fallthru
    _
  // Predicated region
  $region26: #{conv_unet_forward.18} parent=0 // pred_check
    _
  $region27: #{conv_unet_forward.18} parent=0 // pred_check_branch
    %270 = sbr.rel (0) target = $region29
  $region28: #{conv_unet_forward.18} parent=0 // pred_region
    _
  $region29: #{conv_unet_forward.18} parent=0 // pred_fallthru
    _

// kernel: conv_unet_forward.19
$region0: #{conv_unet_forward.19}
  #allocation0 [shape = 'u32[]', space=smem, size = 0x4, offset = 0x4, fixed_abs, tag = 'smem constant byte address 0x4 - core index']
  #allocation1 [shape = 'u32[144,128]{1,0:T(1,128)}', space=vmem, size = 0x12000, scoped, tag = 'internal scratch']
  #allocation2 [shape = 'f32[16,128]{1,0:T(8,128)}', space=vmem, size = 0x2000, scoped, tag = 'scratch operand']
  %s0 = inlined_call_operand.vmem [shape: bf16[16,384], index: 0, kind: input, shape index: {}]
  %s1 = inlined_call_operand.vmem [shape: bf16[384,128], index: 1, kind: input, shape index: {}]
  %s2 = inlined_call_operand.vmem [shape: f32[1,128], index: 2, kind: input, shape index: {}]
  %s3 = inlined_call_operand.vmem [shape: f32[16,128], index: 3, kind: output, shape index: {}]
  %s4 = sld [smem:[#allocation0]]
  $region30: #{conv_unet_forward.19} parent=0
    _
  %s6 = ssub.s32 1, %s4
  %s7 = scalar_select 0, %s6, %s4
  // Predicated region
  $region2: #{conv_unet_forward.19} parent=0 // pred_check
    _
  $region3: #{conv_unet_forward.19} parent=0 // pred_check_branch
    %9 = sbr.rel (0) target = $region5
  $region4: #{conv_unet_forward.19} parent=0 // pred_region
    _
  $region5: #{conv_unet_forward.19} parent=0 // pred_fallthru
    _
  // Predicated region
  $region6: #{conv_unet_forward.19} parent=0 // pred_check
    _
  $region7: #{conv_unet_forward.19} parent=0 // pred_check_branch
    %11 = sbr.rel (0) target = $region9
  $region8: #{conv_unet_forward.19} parent=0 // pred_region
    _
  $region9: #{conv_unet_forward.19} parent=0 // pred_fallthru
    _
  // Predicated region
  $region10: #{conv_unet_forward.19} parent=0 // pred_check
    _
  $region11: #{conv_unet_forward.19} parent=0 // pred_check_branch
    %13 = sbr.rel (0) target = $region13
  $region12: #{conv_unet_forward.19} parent=0 // pred_region
    _
  $region13: #{conv_unet_forward.19} parent=0 // pred_fallthru
    _
  %p15 = scmp.eq.s32.totalorder 0, 0
  // Predicated region
  $region14: #{conv_unet_forward.19} parent=0 // pred_check
    %p16 = pneg %p15
  $region15: #{conv_unet_forward.19} parent=0 // pred_check_branch
    %18 = sbr.rel (%p16) target = $region17
  $region16: #{conv_unet_forward.19} parent=0 // pred_region
    %19 = vst [vmem:[#allocation2] sm:$0xff] 0.0
    %20 = vst [vmem:[#allocation2 + $0x8] sm:$0xff] 0.0
  $region17: #{conv_unet_forward.19} parent=0 // pred_fallthru
    _
  %s21 = smul.u32 0, 384
  %v22 = vld [vmem:[#allocation2] sm:$0xff]
  %v23 = vld [vmem:[#allocation2 + $0x8] sm:$0xff]
  %v24 = vld [vmem:[%s0] sm:$0xff]
  %v25 = vld [vmem:[%s0 + $0x8] sm:$0xf]
  %v26 = vld [vmem:[%s0 + $0xc] sm:$0xff]
  %v27 = vld [vmem:[%s0 + $0x14] sm:$0xf]
  %s28 = sshra.s32 %s21, 3
  %s29 = sand.u32 %s21, 7
  %s30 = smul.addr %s28, 4
  %s31 = scalar_lea.vmem %s1, %s30
  %v32 = vld [vmem:[%s31] sm:$0xf]
  %v33 = vld [vmem:[%s31 + $0x4] sm:$0xf]
  %v34 = vld [vmem:[%s31 + $0x8] sm:$0xf]
  %v35 = vld [vmem:[%s31 + $0xc] sm:$0xf]
  %v36 = vld [vmem:[%s31 + $0x10] sm:$0xf]
  %v37 = vld [vmem:[%s31 + $0x14] sm:$0xf]
  %v38 = vld [vmem:[%s31 + $0x18] sm:$0xf]
  %v39 = vld [vmem:[%s31 + $0x1c] sm:$0xf]
  %v40 = vld [vmem:[%s31 + $0x20] sm:$0xf]
  %v41 = vld [vmem:[%s31 + $0x24] sm:$0xf]
  %v42 = vld [vmem:[%s31 + $0x28] sm:$0xf]
  %v43 = vld [vmem:[%s31 + $0x2c] sm:$0xf]
  %v44 = vld [vmem:[%s31 + $0x30] sm:$0xf]
  %v45 = vld [vmem:[%s31 + $0x34] sm:$0xf]
  %v46 = vld [vmem:[%s31 + $0x38] sm:$0xf]
  %v47 = vld [vmem:[%s31 + $0x3c] sm:$0xf]
  %v48 = vld [vmem:[%s31 + $0x40] sm:$0xf]
  %v49 = vld [vmem:[%s31 + $0x44] sm:$0xf]
  %v50 = vld [vmem:[%s31 + $0x48] sm:$0xf]
  %v51 = vld [vmem:[%s31 + $0x4c] sm:$0xf]
  %v52 = vld [vmem:[%s31 + $0x50] sm:$0xf]
  %v53 = vld [vmem:[%s31 + $0x54] sm:$0xf]
  %v54 = vld [vmem:[%s31 + $0x58] sm:$0xf]
  %v55 = vld [vmem:[%s31 + $0x5c] sm:$0xf]
  %v56 = vld [vmem:[%s31 + $0x60] sm:$0xf]
  %v57 = vld [vmem:[%s31 + $0x64] sm:$0xf]
  %v58 = vld [vmem:[%s31 + $0x68] sm:$0xf]
  %v59 = vld [vmem:[%s31 + $0x6c] sm:$0xf]
  %v60 = vld [vmem:[%s31 + $0x70] sm:$0xf]
  %v61 = vld [vmem:[%s31 + $0x74] sm:$0xf]
  %v62 = vld [vmem:[%s31 + $0x78] sm:$0xf]
  %v63 = vld [vmem:[%s31 + $0x7c] sm:$0xf]
  %v64 = vld [vmem:[%s31 + $0x80] sm:$0xf]
  %v65 = vld [vmem:[%s31 + $0x84] sm:$0xf]
  %v66 = vld [vmem:[%s31 + $0x88] sm:$0xf]
  %v67 = vld [vmem:[%s31 + $0x8c] sm:$0xf]
  %v68 = vld [vmem:[%s31 + $0x90] sm:$0xf]
  %v69 = vld [vmem:[%s31 + $0x94] sm:$0xf]
  %v70 = vld [vmem:[%s31 + $0x98] sm:$0xf]
  %v71 = vld [vmem:[%s31 + $0x9c] sm:$0xf]
  %v72 = vld [vmem:[%s31 + $0xa0] sm:$0xf]
  %v73 = vld [vmem:[%s31 + $0xa4] sm:$0xf]
  %v74 = vld [vmem:[%s31 + $0xa8] sm:$0xf]
  %v75 = vld [vmem:[%s31 + $0xac] sm:$0xf]
  %v76 = vld [vmem:[%s31 + $0xb0] sm:$0xf]
  %v77 = vld [vmem:[%s31 + $0xb4] sm:$0xf]
  %v78 = vld [vmem:[%s31 + $0xb8] sm:$0xf]
  %v79 = vld [vmem:[%s31 + $0xbc] sm:$0xf]
  %v84 = vunpack.c.l.b16 %v24
  %v85 = vunpack.c.h.b16 %v24
  %v86 = vunpack.c.l.b16 %v25
  %v87 = vunpack.c.l.b16 %v26
  %v88 = vunpack.c.h.b16 %v26
  %v89 = vunpack.c.l.b16 %v27
  %v90 = vpack.c.b16 %v87, %v84
  %v91 = vpack.c.b16 %v88, %v85
  %v92 = vpack.c.b16 %v89, %v86
  %v144 = vunpack.c.l.b16 %v32
  %v145 = vunpack.c.l.b16 %v33
  %v146 = vunpack.c.l.b16 %v34
  %v147 = vunpack.c.l.b16 %v35
  %v148 = vunpack.c.l.b16 %v36
  %v149 = vunpack.c.l.b16 %v37
  %v150 = vunpack.c.l.b16 %v38
  %v151 = vunpack.c.l.b16 %v39
  %v152 = vunpack.c.l.b16 %v40
  %v153 = vunpack.c.l.b16 %v41
  %v154 = vunpack.c.l.b16 %v42
  %v155 = vunpack.c.l.b16 %v43
  %v156 = vunpack.c.l.b16 %v44
  %v157 = vunpack.c.l.b16 %v45
  %v158 = vunpack.c.l.b16 %v46
  %v159 = vunpack.c.l.b16 %v47
  %v160 = vunpack.c.l.b16 %v48
  %v161 = vunpack.c.l.b16 %v49
  %v162 = vunpack.c.l.b16 %v50
  %v163 = vunpack.c.l.b16 %v51
  %v164 = vunpack.c.l.b16 %v52
  %v165 = vunpack.c.l.b16 %v53
  %v166 = vunpack.c.l.b16 %v54
  %v167 = vunpack.c.l.b16 %v55
  %v168 = vunpack.c.l.b16 %v56
  %v169 = vunpack.c.l.b16 %v57
  %v170 = vunpack.c.l.b16 %v58
  %v171 = vunpack.c.l.b16 %v59
  %v172 = vunpack.c.l.b16 %v60
  %v173 = vunpack.c.l.b16 %v61
  %v174 = vunpack.c.l.b16 %v62
  %v175 = vunpack.c.l.b16 %v63
  %v176 = vunpack.c.l.b16 %v64
  %v177 = vunpack.c.l.b16 %v65
  %v178 = vunpack.c.l.b16 %v66
  %v179 = vunpack.c.l.b16 %v67
  %v180 = vunpack.c.l.b16 %v68
  %v181 = vunpack.c.l.b16 %v69
  %v182 = vunpack.c.l.b16 %v70
  %v183 = vunpack.c.l.b16 %v71
  %v184 = vunpack.c.l.b16 %v72
  %v185 = vunpack.c.l.b16 %v73
  %v186 = vunpack.c.l.b16 %v74
  %v187 = vunpack.c.l.b16 %v75
  %v188 = vunpack.c.l.b16 %v76
  %v189 = vunpack.c.l.b16 %v77
  %v190 = vunpack.c.l.b16 %v78
  %v191 = vunpack.c.l.b16 %v79
  %v192 = vpack.c.b16 %v145, %v144
  %v193 = vpack.c.b16 %v147, %v146
  %v194 = vpack.c.b16 %v149, %v148
  %v195 = vpack.c.b16 %v151, %v150
  %v196 = vpack.c.b16 %v153, %v152
  %v197 = vpack.c.b16 %v155, %v154
  %v198 = vpack.c.b16 %v157, %v156
  %v199 = vpack.c.b16 %v159, %v158
  %v200 = vpack.c.b16 %v161, %v160
  %v201 = vpack.c.b16 %v163, %v162
  %v202 = vpack.c.b16 %v165, %v164
  %v203 = vpack.c.b16 %v167, %v166
  %v204 = vpack.c.b16 %v169, %v168
  %v205 = vpack.c.b16 %v171, %v170
  %v206 = vpack.c.b16 %v173, %v172
  %v207 = vpack.c.b16 %v175, %v174
  %v208 = vpack.c.b16 %v177, %v176
  %v209 = vpack.c.b16 %v179, %v178
  %v210 = vpack.c.b16 %v181, %v180
  %v211 = vpack.c.b16 %v183, %v182
  %v212 = vpack.c.b16 %v185, %v184
  %v213 = vpack.c.b16 %v187, %v186
  %v214 = vpack.c.b16 %v189, %v188
  %v215 = vpack.c.b16 %v191, %v190
  %240 = vmatprep.subr.bf16.mxu0 0
  %241 = vmatpush1.bf16.msra.mxu0 %v199
  %242 = vmatprep.subr.bf16.mxu0 0
  %243 = vmatpush1.bf16.msra.mxu0 %v198
  %244 = vmatprep.subr.bf16.mxu0 0
  %245 = vmatpush1.bf16.msra.mxu0 %v197
  %246 = vmatprep.subr.bf16.mxu0 0
  %247 = vmatpush1.bf16.msra.mxu0 %v196
  %248 = vmatprep.subr.bf16.mxu0 0
  %249 = vmatpush1.bf16.msra.mxu0 %v195
  %250 = vmatprep.subr.bf16.mxu0 0
  %251 = vmatpush1.bf16.msra.mxu0 %v194
  %252 = vmatprep.subr.bf16.mxu0 0
  %253 = vmatpush1.bf16.msra.mxu0 %v193
  %254 = vmatprep.subr.bf16.mxu0 0
  %255 = vmatpush1.bf16.msra.mxu0 %v192
  %256 = vmatprep.subr.bf16.mxu0 0
  %257 = vmatpush2.bf16.msra.mxu0 %v207
  %258 = vmatprep.subr.bf16.mxu0 0
  %259 = vmatpush2.bf16.msra.mxu0 %v206
  %260 = vmatprep.subr.bf16.mxu0 0
  %261 = vmatpush2.bf16.msra.mxu0 %v205
  %262 = vmatprep.subr.bf16.mxu0 0
  %263 = vmatpush2.bf16.msra.mxu0 %v204
  %264 = vmatprep.subr.bf16.mxu0 0
  %265 = vmatpush2.bf16.msra.mxu0 %v203
  %266 = vmatprep.subr.bf16.mxu0 0
  %267 = vmatpush2.bf16.msra.mxu0 %v202
  %268 = vmatprep.subr.bf16.mxu0 0
  %269 = vmatpush2.bf16.msra.mxu0 %v201
  %270 = vmatprep.subr.bf16.mxu0 0
  %271 = vmatpush2.bf16.msra.mxu0 %v200
  %272 = vmatprep.mubr.bf16.mxu0 %v91
  %273 = vmatmul.mubr.bf16.gmra.mxu0 %v90
  %v274 = vpop.f32.mrf.mxu0
  %v275 = vadd.f32 0.0, %v274
  %v276 = vpop.f32.mrf.mxu0
  %v277 = vpop.f32.mrf.mxu0
  %v278 = vadd.f32 0.0, %v277
  %v279 = vpop.f32.mrf.mxu0
  %280 = vdwg.mxu0
  %281 = vmatprep.subr.bf16.mxu0 0
  %282 = vmatpush1.bf16.msra.mxu0 %v215
  %283 = vmatprep.subr.bf16.mxu0 0
  %284 = vmatpush1.bf16.msra.mxu0 %v214
  %285 = vmatprep.subr.bf16.mxu0 0
  %286 = vmatpush1.bf16.msra.mxu0 %v213
  %287 = vmatprep.subr.bf16.mxu0 0
  %288 = vmatpush1.bf16.msra.mxu0 %v212
  %289 = vmatprep.subr.bf16.mxu0 0
  %290 = vmatpush1.bf16.msra.mxu0 %v211
  %291 = vmatprep.subr.bf16.mxu0 0
  %292 = vmatpush1.bf16.msra.mxu0 %v210
  %293 = vmatprep.subr.bf16.mxu0 0
  %294 = vmatpush1.bf16.msra.mxu0 %v209
  %295 = vmatprep.subr.bf16.mxu0 0
  %296 = vmatpush1.bf16.msra.mxu0 %v208
  %297 = vmatprep.subr.bf16.mxu0 0
  %298 = vmatpush2.bf16.msra.mxu0 0
  %299 = vmatprep.subr.bf16.mxu0 0
  %300 = vmatpush2.bf16.msra.mxu0 0
  %301 = vmatprep.subr.bf16.mxu0 0
  %302 = vmatpush2.bf16.msra.mxu0 0
  %303 = vmatprep.subr.bf16.mxu0 0
  %304 = vmatpush2.bf16.msra.mxu0 0
  %305 = vmatprep.subr.bf16.mxu0 0
  %306 = vmatpush2.bf16.msra.mxu0 0
  %307 = vmatprep.subr.bf16.mxu0 0
  %308 = vmatpush2.bf16.msra.mxu0 0
  %309 = vmatprep.subr.bf16.mxu0 0
  %310 = vmatpush2.bf16.msra.mxu0 0
  %311 = vmatprep.subr.bf16.mxu0 0
  %312 = vmatpush2.bf16.msra.mxu0 0
  %313 = vmatprep.mubr.bf16.mxu0 0
  %314 = vmatmul.mubr.bf16.gmra.mxu0 %v92
  %v315 = vpop.f32.mrf.mxu0
  %v316 = vadd.f32 %v275, %v315
  %v317 = vpop.f32.mrf.mxu0
  %v318 = vpop.f32.mrf.mxu0
  %v319 = vadd.f32 %v278, %v318
  %v320 = vpop.f32.mrf.mxu0
  %321 = vdwg.mxu0
  %v322 = vadd.f32 %v22, %v316
  %v323 = vadd.f32 %v23, %v319
  %324 = vst [vmem:[#allocation2] sm:$0xff] %v322
  %325 = vst [vmem:[#allocation2 + $0x8] sm:$0xff] %v323
  // Predicated region
  $region18: #{conv_unet_forward.19} parent=0 // pred_check
    %p326 = pneg %p15
  $region19: #{conv_unet_forward.19} parent=0 // pred_check_branch
    %328 = sbr.rel (%p326) target = $region21
  $region20: #{conv_unet_forward.19} parent=0 // pred_region
    %v329 = vld [vmem:[#allocation2] sm:$0xff]
    %v330 = vld [vmem:[#allocation2 + $0x8] sm:$0xff]
    %v331 = vld [vmem:[%s2] sm:$0x1]
    %v333 = vlaneseq
    %v334 = vshrl.u32 %v333, 7
    %v335 = vsub.s32 0, %v334
    %v336 = vrot.slane %v331, %v335
    %v338 = vadd.f32 %v329, %v336
    %v339 = vadd.f32 %v330, %v336
    %v340 = vmax.f32 %v338, 0.0
    %v341 = vmax.f32 %v339, 0.0
    %342 = vst [vmem:[%s3] sm:$0xff] %v340
    %343 = vst [vmem:[%s3 + $0x8] sm:$0xff] %v341
  $region21: #{conv_unet_forward.19} parent=0 // pred_fallthru
    _
  // Predicated region
  $region22: #{conv_unet_forward.19} parent=0 // pred_check
    _
  $region23: #{conv_unet_forward.19} parent=0 // pred_check_branch
    %345 = sbr.rel (0) target = $region25
  $region24: #{conv_unet_forward.19} parent=0 // pred_region
    _
  $region25: #{conv_unet_forward.19} parent=0 // pred_fallthru
    _
  // Predicated region
  $region26: #{conv_unet_forward.19} parent=0 // pred_check
    _
  $region27: #{conv_unet_forward.19} parent=0 // pred_check_branch
    %347 = sbr.rel (0) target = $region29
  $region28: #{conv_unet_forward.19} parent=0 // pred_region
    _
  $region29: #{conv_unet_forward.19} parent=0 // pred_fallthru
    _

// kernel: conv_unet_forward.23
$region0: #{conv_unet_forward.23}
  #allocation0 [shape = 'u32[]', space=smem, size = 0x4, offset = 0x4, fixed_abs, tag = 'smem constant byte address 0x4 - core index']
  #allocation1 [shape = 'u32[144,128]{1,0:T(1,128)}', space=vmem, size = 0x12000, scoped, tag = 'internal scratch']
  #allocation2 [shape = 'f32[16,128]{1,0:T(8,128)}', space=vmem, size = 0x2000, scoped, tag = 'scratch operand']
  %s0 = inlined_call_operand.vmem [shape: bf16[16,256], index: 0, kind: input, shape index: {}]
  %s1 = inlined_call_operand.vmem [shape: bf16[256,128], index: 1, kind: input, shape index: {}]
  %s2 = inlined_call_operand.vmem [shape: f32[1,128], index: 2, kind: input, shape index: {}]
  %s3 = inlined_call_operand.vmem [shape: f32[16,128], index: 3, kind: input, shape index: {}]
  %s4 = inlined_call_operand.vmem [shape: f32[16,128], index: 4, kind: output, shape index: {}]
  %s5 = sld [smem:[#allocation0]]
  $region34: #{conv_unet_forward.23} parent=0
    _
  %s7 = ssub.s32 1, %s5
  %s8 = scalar_select 0, %s7, %s5
  // Predicated region
  $region2: #{conv_unet_forward.23} parent=0 // pred_check
    _
  $region3: #{conv_unet_forward.23} parent=0 // pred_check_branch
    %10 = sbr.rel (0) target = $region5
  $region4: #{conv_unet_forward.23} parent=0 // pred_region
    _
  $region5: #{conv_unet_forward.23} parent=0 // pred_fallthru
    _
  // Predicated region
  $region6: #{conv_unet_forward.23} parent=0 // pred_check
    _
  $region7: #{conv_unet_forward.23} parent=0 // pred_check_branch
    %12 = sbr.rel (0) target = $region9
  $region8: #{conv_unet_forward.23} parent=0 // pred_region
    _
  $region9: #{conv_unet_forward.23} parent=0 // pred_fallthru
    _
  // Predicated region
  $region10: #{conv_unet_forward.23} parent=0 // pred_check
    _
  $region11: #{conv_unet_forward.23} parent=0 // pred_check_branch
    %14 = sbr.rel (0) target = $region13
  $region12: #{conv_unet_forward.23} parent=0 // pred_region
    _
  $region13: #{conv_unet_forward.23} parent=0 // pred_fallthru
    _
  // Predicated region
  $region14: #{conv_unet_forward.23} parent=0 // pred_check
    _
  $region15: #{conv_unet_forward.23} parent=0 // pred_check_branch
    %16 = sbr.rel (0) target = $region17
  $region16: #{conv_unet_forward.23} parent=0 // pred_region
    _
  $region17: #{conv_unet_forward.23} parent=0 // pred_fallthru
    _
  %p18 = scmp.eq.s32.totalorder 0, 0
  // Predicated region
  $region18: #{conv_unet_forward.23} parent=0 // pred_check
    %p19 = pneg %p18
  $region19: #{conv_unet_forward.23} parent=0 // pred_check_branch
    %21 = sbr.rel (%p19) target = $region21
  $region20: #{conv_unet_forward.23} parent=0 // pred_region
    %22 = vst [vmem:[#allocation2] sm:$0xff] 0.0
    %23 = vst [vmem:[#allocation2 + $0x8] sm:$0xff] 0.0
  $region21: #{conv_unet_forward.23} parent=0 // pred_fallthru
    _
  %s24 = smul.u32 0, 256
  %v25 = vld [vmem:[#allocation2] sm:$0xff]
  %v26 = vld [vmem:[#allocation2 + $0x8] sm:$0xff]
  %v27 = vld [vmem:[%s0] sm:$0xff]
  %v28 = vld [vmem:[%s0 + $0x8] sm:$0xff]
  %s29 = sshra.s32 %s24, 3
  %s30 = sand.u32 %s24, 7
  %s31 = smul.addr %s29, 4
  %s32 = scalar_lea.vmem %s1, %s31
  %v33 = vld [vmem:[%s32] sm:$0xf]
  %v34 = vld [vmem:[%s32 + $0x4] sm:$0xf]
  %v35 = vld [vmem:[%s32 + $0x8] sm:$0xf]
  %v36 = vld [vmem:[%s32 + $0xc] sm:$0xf]
  %v37 = vld [vmem:[%s32 + $0x10] sm:$0xf]
  %v38 = vld [vmem:[%s32 + $0x14] sm:$0xf]
  %v39 = vld [vmem:[%s32 + $0x18] sm:$0xf]
  %v40 = vld [vmem:[%s32 + $0x1c] sm:$0xf]
  %v41 = vld [vmem:[%s32 + $0x20] sm:$0xf]
  %v42 = vld [vmem:[%s32 + $0x24] sm:$0xf]
  %v43 = vld [vmem:[%s32 + $0x28] sm:$0xf]
  %v44 = vld [vmem:[%s32 + $0x2c] sm:$0xf]
  %v45 = vld [vmem:[%s32 + $0x30] sm:$0xf]
  %v46 = vld [vmem:[%s32 + $0x34] sm:$0xf]
  %v47 = vld [vmem:[%s32 + $0x38] sm:$0xf]
  %v48 = vld [vmem:[%s32 + $0x3c] sm:$0xf]
  %v49 = vld [vmem:[%s32 + $0x40] sm:$0xf]
  %v50 = vld [vmem:[%s32 + $0x44] sm:$0xf]
  %v51 = vld [vmem:[%s32 + $0x48] sm:$0xf]
  %v52 = vld [vmem:[%s32 + $0x4c] sm:$0xf]
  %v53 = vld [vmem:[%s32 + $0x50] sm:$0xf]
  %v54 = vld [vmem:[%s32 + $0x54] sm:$0xf]
  %v55 = vld [vmem:[%s32 + $0x58] sm:$0xf]
  %v56 = vld [vmem:[%s32 + $0x5c] sm:$0xf]
  %v57 = vld [vmem:[%s32 + $0x60] sm:$0xf]
  %v58 = vld [vmem:[%s32 + $0x64] sm:$0xf]
  %v59 = vld [vmem:[%s32 + $0x68] sm:$0xf]
  %v60 = vld [vmem:[%s32 + $0x6c] sm:$0xf]
  %v61 = vld [vmem:[%s32 + $0x70] sm:$0xf]
  %v62 = vld [vmem:[%s32 + $0x74] sm:$0xf]
  %v63 = vld [vmem:[%s32 + $0x78] sm:$0xf]
  %v64 = vld [vmem:[%s32 + $0x7c] sm:$0xf]
  %v67 = vunpack.c.l.b16 %v27
  %v68 = vunpack.c.h.b16 %v27
  %v69 = vunpack.c.l.b16 %v28
  %v70 = vunpack.c.h.b16 %v28
  %v71 = vpack.c.b16 %v69, %v67
  %v72 = vpack.c.b16 %v70, %v68
  %v107 = vunpack.c.l.b16 %v33
  %v108 = vunpack.c.l.b16 %v34
  %v109 = vunpack.c.l.b16 %v35
  %v110 = vunpack.c.l.b16 %v36
  %v111 = vunpack.c.l.b16 %v37
  %v112 = vunpack.c.l.b16 %v38
  %v113 = vunpack.c.l.b16 %v39
  %v114 = vunpack.c.l.b16 %v40
  %v115 = vunpack.c.l.b16 %v41
  %v116 = vunpack.c.l.b16 %v42
  %v117 = vunpack.c.l.b16 %v43
  %v118 = vunpack.c.l.b16 %v44
  %v119 = vunpack.c.l.b16 %v45
  %v120 = vunpack.c.l.b16 %v46
  %v121 = vunpack.c.l.b16 %v47
  %v122 = vunpack.c.l.b16 %v48
  %v123 = vunpack.c.l.b16 %v49
  %v124 = vunpack.c.l.b16 %v50
  %v125 = vunpack.c.l.b16 %v51
  %v126 = vunpack.c.l.b16 %v52
  %v127 = vunpack.c.l.b16 %v53
  %v128 = vunpack.c.l.b16 %v54
  %v129 = vunpack.c.l.b16 %v55
  %v130 = vunpack.c.l.b16 %v56
  %v131 = vunpack.c.l.b16 %v57
  %v132 = vunpack.c.l.b16 %v58
  %v133 = vunpack.c.l.b16 %v59
  %v134 = vunpack.c.l.b16 %v60
  %v135 = vunpack.c.l.b16 %v61
  %v136 = vunpack.c.l.b16 %v62
  %v137 = vunpack.c.l.b16 %v63
  %v138 = vunpack.c.l.b16 %v64
  %v139 = vpack.c.b16 %v108, %v107
  %v140 = vpack.c.b16 %v110, %v109
  %v141 = vpack.c.b16 %v112, %v111
  %v142 = vpack.c.b16 %v114, %v113
  %v143 = vpack.c.b16 %v116, %v115
  %v144 = vpack.c.b16 %v118, %v117
  %v145 = vpack.c.b16 %v120, %v119
  %v146 = vpack.c.b16 %v122, %v121
  %v147 = vpack.c.b16 %v124, %v123
  %v148 = vpack.c.b16 %v126, %v125
  %v149 = vpack.c.b16 %v128, %v127
  %v150 = vpack.c.b16 %v130, %v129
  %v151 = vpack.c.b16 %v132, %v131
  %v152 = vpack.c.b16 %v134, %v133
  %v153 = vpack.c.b16 %v136, %v135
  %v154 = vpack.c.b16 %v138, %v137
  %171 = vmatprep.subr.bf16.mxu0 0
  %172 = vmatpush1.bf16.msra.mxu0 %v146
  %173 = vmatprep.subr.bf16.mxu0 0
  %174 = vmatpush1.bf16.msra.mxu0 %v145
  %175 = vmatprep.subr.bf16.mxu0 0
  %176 = vmatpush1.bf16.msra.mxu0 %v144
  %177 = vmatprep.subr.bf16.mxu0 0
  %178 = vmatpush1.bf16.msra.mxu0 %v143
  %179 = vmatprep.subr.bf16.mxu0 0
  %180 = vmatpush1.bf16.msra.mxu0 %v142
  %181 = vmatprep.subr.bf16.mxu0 0
  %182 = vmatpush1.bf16.msra.mxu0 %v141
  %183 = vmatprep.subr.bf16.mxu0 0
  %184 = vmatpush1.bf16.msra.mxu0 %v140
  %185 = vmatprep.subr.bf16.mxu0 0
  %186 = vmatpush1.bf16.msra.mxu0 %v139
  %187 = vmatprep.subr.bf16.mxu0 0
  %188 = vmatpush2.bf16.msra.mxu0 %v154
  %189 = vmatprep.subr.bf16.mxu0 0
  %190 = vmatpush2.bf16.msra.mxu0 %v153
  %191 = vmatprep.subr.bf16.mxu0 0
  %192 = vmatpush2.bf16.msra.mxu0 %v152
  %193 = vmatprep.subr.bf16.mxu0 0
  %194 = vmatpush2.bf16.msra.mxu0 %v151
  %195 = vmatprep.subr.bf16.mxu0 0
  %196 = vmatpush2.bf16.msra.mxu0 %v150
  %197 = vmatprep.subr.bf16.mxu0 0
  %198 = vmatpush2.bf16.msra.mxu0 %v149
  %199 = vmatprep.subr.bf16.mxu0 0
  %200 = vmatpush2.bf16.msra.mxu0 %v148
  %201 = vmatprep.subr.bf16.mxu0 0
  %202 = vmatpush2.bf16.msra.mxu0 %v147
  %203 = vmatprep.mubr.bf16.mxu0 %v72
  %204 = vmatmul.mubr.bf16.gmra.mxu0 %v71
  %v205 = vpop.f32.mrf.mxu0
  %v206 = vadd.f32 0.0, %v205
  %v207 = vpop.f32.mrf.mxu0
  %v208 = vpop.f32.mrf.mxu0
  %v209 = vadd.f32 0.0, %v208
  %v210 = vpop.f32.mrf.mxu0
  %211 = vdwg.mxu0
  %v212 = vadd.f32 %v25, %v206
  %v213 = vadd.f32 %v26, %v209
  %214 = vst [vmem:[#allocation2] sm:$0xff] %v212
  %215 = vst [vmem:[#allocation2 + $0x8] sm:$0xff] %v213
  // Predicated region
  $region22: #{conv_unet_forward.23} parent=0 // pred_check
    %p216 = pneg %p18
  $region23: #{conv_unet_forward.23} parent=0 // pred_check_branch
    %218 = sbr.rel (%p216) target = $region25
  $region24: #{conv_unet_forward.23} parent=0 // pred_region
    %v219 = vld [vmem:[#allocation2] sm:$0xff]
    %v220 = vld [vmem:[#allocation2 + $0x8] sm:$0xff]
    %v221 = vld [vmem:[%s2] sm:$0x1]
    %v223 = vlaneseq
    %v224 = vshrl.u32 %v223, 7
    %v225 = vsub.s32 0, %v224
    %v226 = vrot.slane %v221, %v225
    %v228 = vadd.f32 %v219, %v226
    %v229 = vadd.f32 %v220, %v226
    %v230 = vmax.f32 %v228, 0.0
    %v231 = vmax.f32 %v229, 0.0
    %v232 = vld [vmem:[%s3] sm:$0xff]
    %v233 = vld [vmem:[%s3 + $0x8] sm:$0xff]
    %v234 = vadd.f32 %v230, %v232
    %v235 = vadd.f32 %v231, %v233
    %236 = vst [vmem:[%s4] sm:$0xff] %v234
    %237 = vst [vmem:[%s4 + $0x8] sm:$0xff] %v235
  $region25: #{conv_unet_forward.23} parent=0 // pred_fallthru
    _
  // Predicated region
  $region26: #{conv_unet_forward.23} parent=0 // pred_check
    _
  $region27: #{conv_unet_forward.23} parent=0 // pred_check_branch
    %239 = sbr.rel (0) target = $region29
  $region28: #{conv_unet_forward.23} parent=0 // pred_region
    _
  $region29: #{conv_unet_forward.23} parent=0 // pred_fallthru
    _
  // Predicated region
  $region30: #{conv_unet_forward.23} parent=0 // pred_check
    _
  $region31: #{conv_unet_forward.23} parent=0 // pred_check_branch
    %241 = sbr.rel (0) target = $region33
  $region32: #{conv_unet_forward.23} parent=0 // pred_region
    _
  $region33: #{conv_unet_forward.23} parent=0 // pred_fallthru
    _

// kernel: conv_unet_forward.22
$region0: #{conv_unet_forward.22}
  #allocation0 [shape = 'u32[]', space=smem, size = 0x4, offset = 0x4, fixed_abs, tag = 'smem constant byte address 0x4 - core index']
  #allocation1 [shape = 'u32[144,128]{1,0:T(1,128)}', space=vmem, size = 0x12000, scoped, tag = 'internal scratch']
  #allocation2 [shape = 'f32[16,128]{1,0:T(8,128)}', space=vmem, size = 0x2000, scoped, tag = 'scratch operand']
  %s0 = inlined_call_operand.vmem [shape: bf16[16,128], index: 0, kind: input, shape index: {}]
  %s1 = inlined_call_operand.vmem [shape: bf16[128,128], index: 1, kind: input, shape index: {}]
  %s2 = inlined_call_operand.vmem [shape: f32[1,128], index: 2, kind: input, shape index: {}]
  %s3 = inlined_call_operand.vmem [shape: f32[16,128], index: 3, kind: input, shape index: {}]
  %s4 = inlined_call_operand.vmem [shape: f32[16,128], index: 4, kind: output, shape index: {}]
  %s5 = sld [smem:[#allocation0]]
  $region34: #{conv_unet_forward.22} parent=0
    _
  %s7 = ssub.s32 1, %s5
  %s8 = scalar_select 0, %s7, %s5
  // Predicated region
  $region2: #{conv_unet_forward.22} parent=0 // pred_check
    _
  $region3: #{conv_unet_forward.22} parent=0 // pred_check_branch
    %10 = sbr.rel (0) target = $region5
  $region4: #{conv_unet_forward.22} parent=0 // pred_region
    _
  $region5: #{conv_unet_forward.22} parent=0 // pred_fallthru
    _
  // Predicated region
  $region6: #{conv_unet_forward.22} parent=0 // pred_check
    _
  $region7: #{conv_unet_forward.22} parent=0 // pred_check_branch
    %12 = sbr.rel (0) target = $region9
  $region8: #{conv_unet_forward.22} parent=0 // pred_region
    _
  $region9: #{conv_unet_forward.22} parent=0 // pred_fallthru
    _
  // Predicated region
  $region10: #{conv_unet_forward.22} parent=0 // pred_check
    _
  $region11: #{conv_unet_forward.22} parent=0 // pred_check_branch
    %14 = sbr.rel (0) target = $region13
  $region12: #{conv_unet_forward.22} parent=0 // pred_region
    _
  $region13: #{conv_unet_forward.22} parent=0 // pred_fallthru
    _
  // Predicated region
  $region14: #{conv_unet_forward.22} parent=0 // pred_check
    _
  $region15: #{conv_unet_forward.22} parent=0 // pred_check_branch
    %16 = sbr.rel (0) target = $region17
  $region16: #{conv_unet_forward.22} parent=0 // pred_region
    _
  $region17: #{conv_unet_forward.22} parent=0 // pred_fallthru
    _
  %p18 = scmp.eq.s32.totalorder 0, 0
  // Predicated region
  $region18: #{conv_unet_forward.22} parent=0 // pred_check
    %p19 = pneg %p18
  $region19: #{conv_unet_forward.22} parent=0 // pred_check_branch
    %21 = sbr.rel (%p19) target = $region21
  $region20: #{conv_unet_forward.22} parent=0 // pred_region
    %22 = vst [vmem:[#allocation2] sm:$0xff] 0.0
    %23 = vst [vmem:[#allocation2 + $0x8] sm:$0xff] 0.0
  $region21: #{conv_unet_forward.22} parent=0 // pred_fallthru
    _
  %s24 = smul.u32 0, 128
  %v25 = vld [vmem:[#allocation2] sm:$0xff]
  %v26 = vld [vmem:[#allocation2 + $0x8] sm:$0xff]
  %v27 = vld [vmem:[%s0] sm:$0xf]
  %v28 = vld [vmem:[%s0 + $0x4] sm:$0xf]
  %s29 = sshra.s32 %s24, 3
  %s30 = sand.u32 %s24, 7
  %s31 = smul.addr %s29, 4
  %s32 = scalar_lea.vmem %s1, %s31
  %v33 = vld [vmem:[%s32] sm:$0xf]
  %v34 = vld [vmem:[%s32 + $0x4] sm:$0xf]
  %v35 = vld [vmem:[%s32 + $0x8] sm:$0xf]
  %v36 = vld [vmem:[%s32 + $0xc] sm:$0xf]
  %v37 = vld [vmem:[%s32 + $0x10] sm:$0xf]
  %v38 = vld [vmem:[%s32 + $0x14] sm:$0xf]
  %v39 = vld [vmem:[%s32 + $0x18] sm:$0xf]
  %v40 = vld [vmem:[%s32 + $0x1c] sm:$0xf]
  %v41 = vld [vmem:[%s32 + $0x20] sm:$0xf]
  %v42 = vld [vmem:[%s32 + $0x24] sm:$0xf]
  %v43 = vld [vmem:[%s32 + $0x28] sm:$0xf]
  %v44 = vld [vmem:[%s32 + $0x2c] sm:$0xf]
  %v45 = vld [vmem:[%s32 + $0x30] sm:$0xf]
  %v46 = vld [vmem:[%s32 + $0x34] sm:$0xf]
  %v47 = vld [vmem:[%s32 + $0x38] sm:$0xf]
  %v48 = vld [vmem:[%s32 + $0x3c] sm:$0xf]
  %v51 = vunpack.c.l.b16 %v27
  %v52 = vunpack.c.l.b16 %v28
  %v53 = vpack.c.b16 %v52, %v51
  %v71 = vunpack.c.l.b16 %v33
  %v72 = vunpack.c.l.b16 %v34
  %v73 = vunpack.c.l.b16 %v35
  %v74 = vunpack.c.l.b16 %v36
  %v75 = vunpack.c.l.b16 %v37
  %v76 = vunpack.c.l.b16 %v38
  %v77 = vunpack.c.l.b16 %v39
  %v78 = vunpack.c.l.b16 %v40
  %v79 = vunpack.c.l.b16 %v41
  %v80 = vunpack.c.l.b16 %v42
  %v81 = vunpack.c.l.b16 %v43
  %v82 = vunpack.c.l.b16 %v44
  %v83 = vunpack.c.l.b16 %v45
  %v84 = vunpack.c.l.b16 %v46
  %v85 = vunpack.c.l.b16 %v47
  %v86 = vunpack.c.l.b16 %v48
  %v87 = vpack.c.b16 %v72, %v71
  %v88 = vpack.c.b16 %v74, %v73
  %v89 = vpack.c.b16 %v76, %v75
  %v90 = vpack.c.b16 %v78, %v77
  %v91 = vpack.c.b16 %v80, %v79
  %v92 = vpack.c.b16 %v82, %v81
  %v93 = vpack.c.b16 %v84, %v83
  %v94 = vpack.c.b16 %v86, %v85
  %103 = vmatprep.subr.bf16.mxu0 0
  %104 = vmatpush1.bf16.msra.mxu0 %v94
  %105 = vmatprep.subr.bf16.mxu0 0
  %106 = vmatpush1.bf16.msra.mxu0 %v93
  %107 = vmatprep.subr.bf16.mxu0 0
  %108 = vmatpush1.bf16.msra.mxu0 %v92
  %109 = vmatprep.subr.bf16.mxu0 0
  %110 = vmatpush1.bf16.msra.mxu0 %v91
  %111 = vmatprep.subr.bf16.mxu0 0
  %112 = vmatpush1.bf16.msra.mxu0 %v90
  %113 = vmatprep.subr.bf16.mxu0 0
  %114 = vmatpush1.bf16.msra.mxu0 %v89
  %115 = vmatprep.subr.bf16.mxu0 0
  %116 = vmatpush1.bf16.msra.mxu0 %v88
  %117 = vmatprep.subr.bf16.mxu0 0
  %118 = vmatpush1.bf16.msra.mxu0 %v87
  %119 = vmatprep.subr.bf16.mxu0 0
  %120 = vmatpush2.bf16.msra.mxu0 0
  %121 = vmatprep.subr.bf16.mxu0 0
  %122 = vmatpush2.bf16.msra.mxu0 0
  %123 = vmatprep.subr.bf16.mxu0 0
  %124 = vmatpush2.bf16.msra.mxu0 0
  %125 = vmatprep.subr.bf16.mxu0 0
  %126 = vmatpush2.bf16.msra.mxu0 0
  %127 = vmatprep.subr.bf16.mxu0 0
  %128 = vmatpush2.bf16.msra.mxu0 0
  %129 = vmatprep.subr.bf16.mxu0 0
  %130 = vmatpush2.bf16.msra.mxu0 0
  %131 = vmatprep.subr.bf16.mxu0 0
  %132 = vmatpush2.bf16.msra.mxu0 0
  %133 = vmatprep.subr.bf16.mxu0 0
  %134 = vmatpush2.bf16.msra.mxu0 0
  %135 = vmatprep.mubr.bf16.mxu0 0
  %136 = vmatmul.mubr.bf16.gmra.mxu0 %v53
  %v137 = vpop.f32.mrf.mxu0
  %v138 = vadd.f32 0.0, %v137
  %v139 = vpop.f32.mrf.mxu0
  %v140 = vpop.f32.mrf.mxu0
  %v141 = vadd.f32 0.0, %v140
  %v142 = vpop.f32.mrf.mxu0
  %143 = vdwg.mxu0
  %v144 = vadd.f32 %v25, %v138
  %v145 = vadd.f32 %v26, %v141
  %146 = vst [vmem:[#allocation2] sm:$0xff] %v144
  %147 = vst [vmem:[#allocation2 + $0x8] sm:$0xff] %v145
  // Predicated region
  $region22: #{conv_unet_forward.22} parent=0 // pred_check
    %p148 = pneg %p18
  $region23: #{conv_unet_forward.22} parent=0 // pred_check_branch
    %150 = sbr.rel (%p148) target = $region25
  $region24: #{conv_unet_forward.22} parent=0 // pred_region
    %v151 = vld [vmem:[#allocation2] sm:$0xff]
    %v152 = vld [vmem:[#allocation2 + $0x8] sm:$0xff]
    %v153 = vld [vmem:[%s2] sm:$0x1]
    %v155 = vlaneseq
    %v156 = vshrl.u32 %v155, 7
    %v157 = vsub.s32 0, %v156
    %v158 = vrot.slane %v153, %v157
    %v160 = vadd.f32 %v151, %v158
    %v161 = vadd.f32 %v152, %v158
    %v162 = vmax.f32 %v160, 0.0
    %v163 = vmax.f32 %v161, 0.0
    %v164 = vld [vmem:[%s3] sm:$0xff]
    %v165 = vld [vmem:[%s3 + $0x8] sm:$0xff]
    %v166 = vadd.f32 %v162, %v164
    %v167 = vadd.f32 %v163, %v165
    %168 = vst [vmem:[%s4] sm:$0xff] %v166
    %169 = vst [vmem:[%s4 + $0x8] sm:$0xff] %v167
  $region25: #{conv_unet_forward.22} parent=0 // pred_fallthru
    _
  // Predicated region
  $region26: #{conv_unet_forward.22} parent=0 // pred_check
    _
  $region27: #{conv_unet_forward.22} parent=0 // pred_check_branch
    %171 = sbr.rel (0) target = $region29
  $region28: #{conv_unet_forward.22} parent=0 // pred_region
    _
  $region29: #{conv_unet_forward.22} parent=0 // pred_fallthru
    _
  // Predicated region
  $region30: #{conv_unet_forward.22} parent=0 // pred_check
    _
  $region31: #{conv_unet_forward.22} parent=0 // pred_check_branch
    %173 = sbr.rel (0) target = $region33
  $region32: #{conv_unet_forward.22} parent=0 // pred_region
    _
  $region33: #{conv_unet_forward.22} parent=0 // pred_fallthru
    _

// kernel: conv_unet_forward.27
$region0: #{conv_unet_forward.27}
  #allocation0 [shape = 'u32[]', space=smem, size = 0x4, offset = 0x4, fixed_abs, tag = 'smem constant byte address 0x4 - core index']
  #allocation1 [shape = 'u32[144,128]{1,0:T(1,128)}', space=vmem, size = 0x12000, scoped, tag = 'internal scratch']
  #allocation2 [shape = 'f32[32,128]{1,0:T(8,128)}', space=vmem, size = 0x4000, scoped, tag = 'scratch operand']
  %s0 = inlined_call_operand.vmem [shape: bf16[32,128], index: 0, kind: input, shape index: {}]
  %s1 = inlined_call_operand.vmem [shape: bf16[128,128], index: 1, kind: input, shape index: {}]
  %s2 = inlined_call_operand.vmem [shape: f32[1,128], index: 2, kind: input, shape index: {}]
  %s3 = inlined_call_operand.vmem [shape: f32[32,128], index: 3, kind: input, shape index: {}]
  %s4 = inlined_call_operand.vmem [shape: f32[32,128], index: 4, kind: output, shape index: {}]
  %s5 = sld [smem:[#allocation0]]
  $region34: #{conv_unet_forward.27} parent=0
    _
  %s7 = ssub.s32 1, %s5
  %s8 = scalar_select 0, %s7, %s5
  // Predicated region
  $region2: #{conv_unet_forward.27} parent=0 // pred_check
    _
  $region3: #{conv_unet_forward.27} parent=0 // pred_check_branch
    %10 = sbr.rel (0) target = $region5
  $region4: #{conv_unet_forward.27} parent=0 // pred_region
    _
  $region5: #{conv_unet_forward.27} parent=0 // pred_fallthru
    _
  // Predicated region
  $region6: #{conv_unet_forward.27} parent=0 // pred_check
    _
  $region7: #{conv_unet_forward.27} parent=0 // pred_check_branch
    %12 = sbr.rel (0) target = $region9
  $region8: #{conv_unet_forward.27} parent=0 // pred_region
    _
  $region9: #{conv_unet_forward.27} parent=0 // pred_fallthru
    _
  // Predicated region
  $region10: #{conv_unet_forward.27} parent=0 // pred_check
    _
  $region11: #{conv_unet_forward.27} parent=0 // pred_check_branch
    %14 = sbr.rel (0) target = $region13
  $region12: #{conv_unet_forward.27} parent=0 // pred_region
    _
  $region13: #{conv_unet_forward.27} parent=0 // pred_fallthru
    _
  // Predicated region
  $region14: #{conv_unet_forward.27} parent=0 // pred_check
    _
  $region15: #{conv_unet_forward.27} parent=0 // pred_check_branch
    %16 = sbr.rel (0) target = $region17
  $region16: #{conv_unet_forward.27} parent=0 // pred_region
    _
  $region17: #{conv_unet_forward.27} parent=0 // pred_fallthru
    _
  %p18 = scmp.eq.s32.totalorder 0, 0
  // Predicated region
  $region18: #{conv_unet_forward.27} parent=0 // pred_check
    %p19 = pneg %p18
  $region19: #{conv_unet_forward.27} parent=0 // pred_check_branch
    %21 = sbr.rel (%p19) target = $region21
  $region20: #{conv_unet_forward.27} parent=0 // pred_region
    %22 = vst [vmem:[#allocation2] sm:$0xff] 0.0
    %23 = vst [vmem:[#allocation2 + $0x8] sm:$0xff] 0.0
    %24 = vst [vmem:[#allocation2 + $0x10] sm:$0xff] 0.0
    %25 = vst [vmem:[#allocation2 + $0x18] sm:$0xff] 0.0
  $region21: #{conv_unet_forward.27} parent=0 // pred_fallthru
    _
  %s26 = smul.u32 0, 128
  %v27 = vld [vmem:[#allocation2] sm:$0xff]
  %v28 = vld [vmem:[#allocation2 + $0x8] sm:$0xff]
  %v29 = vld [vmem:[#allocation2 + $0x10] sm:$0xff]
  %v30 = vld [vmem:[#allocation2 + $0x18] sm:$0xff]
  %v31 = vld [vmem:[%s0] sm:$0xf]
  %v32 = vld [vmem:[%s0 + $0x4] sm:$0xf]
  %v33 = vld [vmem:[%s0 + $0x8] sm:$0xf]
  %v34 = vld [vmem:[%s0 + $0xc] sm:$0xf]
  %s35 = sshra.s32 %s26, 3
  %s36 = sand.u32 %s26, 7
  %s37 = smul.addr %s35, 4
  %s38 = scalar_lea.vmem %s1, %s37
  %v39 = vld [vmem:[%s38] sm:$0xf]
  %v40 = vld [vmem:[%s38 + $0x4] sm:$0xf]
  %v41 = vld [vmem:[%s38 + $0x8] sm:$0xf]
  %v42 = vld [vmem:[%s38 + $0xc] sm:$0xf]
  %v43 = vld [vmem:[%s38 + $0x10] sm:$0xf]
  %v44 = vld [vmem:[%s38 + $0x14] sm:$0xf]
  %v45 = vld [vmem:[%s38 + $0x18] sm:$0xf]
  %v46 = vld [vmem:[%s38 + $0x1c] sm:$0xf]
  %v47 = vld [vmem:[%s38 + $0x20] sm:$0xf]
  %v48 = vld [vmem:[%s38 + $0x24] sm:$0xf]
  %v49 = vld [vmem:[%s38 + $0x28] sm:$0xf]
  %v50 = vld [vmem:[%s38 + $0x2c] sm:$0xf]
  %v51 = vld [vmem:[%s38 + $0x30] sm:$0xf]
  %v52 = vld [vmem:[%s38 + $0x34] sm:$0xf]
  %v53 = vld [vmem:[%s38 + $0x38] sm:$0xf]
  %v54 = vld [vmem:[%s38 + $0x3c] sm:$0xf]
  %v59 = vunpack.c.l.b16 %v31
  %v60 = vunpack.c.l.b16 %v32
  %v61 = vunpack.c.l.b16 %v33
  %v62 = vunpack.c.l.b16 %v34
  %v63 = vpack.c.b16 %v60, %v59
  %v64 = vpack.c.b16 %v62, %v61
  %v83 = vunpack.c.l.b16 %v39
  %v84 = vunpack.c.l.b16 %v40
  %v85 = vunpack.c.l.b16 %v41
  %v86 = vunpack.c.l.b16 %v42
  %v87 = vunpack.c.l.b16 %v43
  %v88 = vunpack.c.l.b16 %v44
  %v89 = vunpack.c.l.b16 %v45
  %v90 = vunpack.c.l.b16 %v46
  %v91 = vunpack.c.l.b16 %v47
  %v92 = vunpack.c.l.b16 %v48
  %v93 = vunpack.c.l.b16 %v49
  %v94 = vunpack.c.l.b16 %v50
  %v95 = vunpack.c.l.b16 %v51
  %v96 = vunpack.c.l.b16 %v52
  %v97 = vunpack.c.l.b16 %v53
  %v98 = vunpack.c.l.b16 %v54
  %v99 = vpack.c.b16 %v84, %v83
  %v100 = vpack.c.b16 %v86, %v85
  %v101 = vpack.c.b16 %v88, %v87
  %v102 = vpack.c.b16 %v90, %v89
  %v103 = vpack.c.b16 %v92, %v91
  %v104 = vpack.c.b16 %v94, %v93
  %v105 = vpack.c.b16 %v96, %v95
  %v106 = vpack.c.b16 %v98, %v97
  %115 = vmatprep.subr.bf16.mxu0 0
  %116 = vmatpush1.bf16.msra.mxu0 %v106
  %117 = vmatprep.subr.bf16.mxu0 0
  %118 = vmatpush1.bf16.msra.mxu0 %v105
  %119 = vmatprep.subr.bf16.mxu0 0
  %120 = vmatpush1.bf16.msra.mxu0 %v104
  %121 = vmatprep.subr.bf16.mxu0 0
  %122 = vmatpush1.bf16.msra.mxu0 %v103
  %123 = vmatprep.subr.bf16.mxu0 0
  %124 = vmatpush1.bf16.msra.mxu0 %v102
  %125 = vmatprep.subr.bf16.mxu0 0
  %126 = vmatpush1.bf16.msra.mxu0 %v101
  %127 = vmatprep.subr.bf16.mxu0 0
  %128 = vmatpush1.bf16.msra.mxu0 %v100
  %129 = vmatprep.subr.bf16.mxu0 0
  %130 = vmatpush1.bf16.msra.mxu0 %v99
  %131 = vmatprep.subr.bf16.mxu0 0
  %132 = vmatpush2.bf16.msra.mxu0 0
  %133 = vmatprep.subr.bf16.mxu0 0
  %134 = vmatpush2.bf16.msra.mxu0 0
  %135 = vmatprep.subr.bf16.mxu0 0
  %136 = vmatpush2.bf16.msra.mxu0 0
  %137 = vmatprep.subr.bf16.mxu0 0
  %138 = vmatpush2.bf16.msra.mxu0 0
  %139 = vmatprep.subr.bf16.mxu0 0
  %140 = vmatpush2.bf16.msra.mxu0 0
  %141 = vmatprep.subr.bf16.mxu0 0
  %142 = vmatpush2.bf16.msra.mxu0 0
  %143 = vmatprep.subr.bf16.mxu0 0
  %144 = vmatpush2.bf16.msra.mxu0 0
  %145 = vmatprep.subr.bf16.mxu0 0
  %146 = vmatpush2.bf16.msra.mxu0 0
  %147 = vmatprep.mubr.bf16.mxu0 0
  %148 = vmatmul.mubr.bf16.gmra.mxu0 %v63
  %v149 = vpop.f32.mrf.mxu0
  %v150 = vadd.f32 0.0, %v149
  %v151 = vpop.f32.mrf.mxu0
  %v152 = vpop.f32.mrf.mxu0
  %v153 = vadd.f32 0.0, %v152
  %v154 = vpop.f32.mrf.mxu0
  %155 = vmatprep.mubr.bf16.mxu0 0
  %156 = vmatmul.mubr.bf16.gmra.mxu0 %v64
  %v157 = vpop.f32.mrf.mxu0
  %v158 = vadd.f32 0.0, %v157
  %v159 = vpop.f32.mrf.mxu0
  %v160 = vpop.f32.mrf.mxu0
  %v161 = vadd.f32 0.0, %v160
  %v162 = vpop.f32.mrf.mxu0
  %163 = vdwg.mxu0
  %v164 = vadd.f32 %v27, %v150
  %v165 = vadd.f32 %v28, %v153
  %v166 = vadd.f32 %v29, %v158
  %v167 = vadd.f32 %v30, %v161
  %168 = vst [vmem:[#allocation2] sm:$0xff] %v164
  %169 = vst [vmem:[#allocation2 + $0x8] sm:$0xff] %v165
  %170 = vst [vmem:[#allocation2 + $0x10] sm:$0xff] %v166
  %171 = vst [vmem:[#allocation2 + $0x18] sm:$0xff] %v167
  // Predicated region
  $region22: #{conv_unet_forward.27} parent=0 // pred_check
    %p172 = pneg %p18
  $region23: #{conv_unet_forward.27} parent=0 // pred_check_branch
    %174 = sbr.rel (%p172) target = $region25
  $region24: #{conv_unet_forward.27} parent=0 // pred_region
    %v175 = vld [vmem:[#allocation2] sm:$0xff]
    %v176 = vld [vmem:[#allocation2 + $0x8] sm:$0xff]
    %v177 = vld [vmem:[#allocation2 + $0x10] sm:$0xff]
    %v178 = vld [vmem:[#allocation2 + $0x18] sm:$0xff]
    %v179 = vld [vmem:[%s2] sm:$0x1]
    %v181 = vlaneseq
    %v182 = vshrl.u32 %v181, 7
    %v183 = vsub.s32 0, %v182
    %v184 = vrot.slane %v179, %v183
    %v186 = vadd.f32 %v175, %v184
    %v187 = vadd.f32 %v176, %v184
    %v188 = vadd.f32 %v177, %v184
    %v189 = vadd.f32 %v178, %v184
    %v190 = vmax.f32 %v186, 0.0
    %v191 = vmax.f32 %v187, 0.0
    %v192 = vmax.f32 %v188, 0.0
    %v193 = vmax.f32 %v189, 0.0
    %v194 = vld [vmem:[%s3] sm:$0xff]
    %v195 = vld [vmem:[%s3 + $0x8] sm:$0xff]
    %v196 = vld [vmem:[%s3 + $0x10] sm:$0xff]
    %v197 = vld [vmem:[%s3 + $0x18] sm:$0xff]
    %v198 = vadd.f32 %v190, %v194
    %v199 = vadd.f32 %v191, %v195
    %v200 = vadd.f32 %v192, %v196
    %v201 = vadd.f32 %v193, %v197
    %202 = vst [vmem:[%s4] sm:$0xff] %v198
    %203 = vst [vmem:[%s4 + $0x8] sm:$0xff] %v199
    %204 = vst [vmem:[%s4 + $0x10] sm:$0xff] %v200
    %205 = vst [vmem:[%s4 + $0x18] sm:$0xff] %v201
  $region25: #{conv_unet_forward.27} parent=0 // pred_fallthru
    _
  // Predicated region
  $region26: #{conv_unet_forward.27} parent=0 // pred_check
    _
  $region27: #{conv_unet_forward.27} parent=0 // pred_check_branch
    %207 = sbr.rel (0) target = $region29
  $region28: #{conv_unet_forward.27} parent=0 // pred_region
    _
  $region29: #{conv_unet_forward.27} parent=0 // pred_fallthru
    _
  // Predicated region
  $region30: #{conv_unet_forward.27} parent=0 // pred_check
    _
  $region31: #{conv_unet_forward.27} parent=0 // pred_check_branch
    %209 = sbr.rel (0) target = $region33
  $region32: #{conv_unet_forward.27} parent=0 // pred_region
    _
  $region33: #{conv_unet_forward.27} parent=0 // pred_fallthru
    _

// kernel: conv_unet_forward.31
$region0: #{conv_unet_forward.31}
  #allocation0 [shape = 'u32[]', space=smem, size = 0x4, offset = 0x4, fixed_abs, tag = 'smem constant byte address 0x4 - core index']
  #allocation1 [shape = 'u32[144,128]{1,0:T(1,128)}', space=vmem, size = 0x12000, scoped, tag = 'internal scratch']
  #allocation2 [shape = 'f32[128,128]{1,0:T(8,128)}', space=vmem, size = 0x10000, scoped, tag = 'scratch operand']
  %s0 = inlined_call_operand.vmem [shape: bf16[128,128], index: 0, kind: input, shape index: {}]
  %s1 = inlined_call_operand.vmem [shape: bf16[128,128], index: 1, kind: input, shape index: {}]
  %s2 = inlined_call_operand.vmem [shape: f32[1,128], index: 2, kind: input, shape index: {}]
  %s3 = inlined_call_operand.vmem [shape: f32[128,128], index: 3, kind: output, shape index: {}]
  %s4 = sld [smem:[#allocation0]]
  $region30: #{conv_unet_forward.31} parent=0
    _
  %s6 = ssub.s32 1, %s4
  %s7 = scalar_select 0, %s6, %s4
  // Predicated region
  $region2: #{conv_unet_forward.31} parent=0 // pred_check
    _
  $region3: #{conv_unet_forward.31} parent=0 // pred_check_branch
    %9 = sbr.rel (0) target = $region5
  $region4: #{conv_unet_forward.31} parent=0 // pred_region
    _
  $region5: #{conv_unet_forward.31} parent=0 // pred_fallthru
    _
  // Predicated region
  $region6: #{conv_unet_forward.31} parent=0 // pred_check
    _
  $region7: #{conv_unet_forward.31} parent=0 // pred_check_branch
    %11 = sbr.rel (0) target = $region9
  $region8: #{conv_unet_forward.31} parent=0 // pred_region
    _
  $region9: #{conv_unet_forward.31} parent=0 // pred_fallthru
    _
  // Predicated region
  $region10: #{conv_unet_forward.31} parent=0 // pred_check
    _
  $region11: #{conv_unet_forward.31} parent=0 // pred_check_branch
    %13 = sbr.rel (0) target = $region13
  $region12: #{conv_unet_forward.31} parent=0 // pred_region
    _
  $region13: #{conv_unet_forward.31} parent=0 // pred_fallthru
    _
  %p15 = scmp.eq.s32.totalorder 0, 0
  // Predicated region
  $region14: #{conv_unet_forward.31} parent=0 // pred_check
    %p16 = pneg %p15
  $region15: #{conv_unet_forward.31} parent=0 // pred_check_branch
    %18 = sbr.rel (%p16) target = $region17
  $region16: #{conv_unet_forward.31} parent=0 // pred_region
    %19 = vst [vmem:[#allocation2] sm:$0xff] 0.0
    %20 = vst [vmem:[#allocation2 + $0x8] sm:$0xff] 0.0
    %21 = vst [vmem:[#allocation2 + $0x10] sm:$0xff] 0.0
    %22 = vst [vmem:[#allocation2 + $0x18] sm:$0xff] 0.0
    %23 = vst [vmem:[#allocation2 + $0x20] sm:$0xff] 0.0
    %24 = vst [vmem:[#allocation2 + $0x28] sm:$0xff] 0.0
    %25 = vst [vmem:[#allocation2 + $0x30] sm:$0xff] 0.0
    %26 = vst [vmem:[#allocation2 + $0x38] sm:$0xff] 0.0
    %27 = vst [vmem:[#allocation2 + $0x40] sm:$0xff] 0.0
    %28 = vst [vmem:[#allocation2 + $0x48] sm:$0xff] 0.0
    %29 = vst [vmem:[#allocation2 + $0x50] sm:$0xff] 0.0
    %30 = vst [vmem:[#allocation2 + $0x58] sm:$0xff] 0.0
    %31 = vst [vmem:[#allocation2 + $0x60] sm:$0xff] 0.0
    %32 = vst [vmem:[#allocation2 + $0x68] sm:$0xff] 0.0
    %33 = vst [vmem:[#allocation2 + $0x70] sm:$0xff] 0.0
    %34 = vst [vmem:[#allocation2 + $0x78] sm:$0xff] 0.0
  $region17: #{conv_unet_forward.31} parent=0 // pred_fallthru
    _
  %s35 = smul.u32 0, 128
  %v36 = vld [vmem:[#allocation2] sm:$0xff]
  %v37 = vld [vmem:[#allocation2 + $0x8] sm:$0xff]
  %v38 = vld [vmem:[#allocation2 + $0x10] sm:$0xff]
  %v39 = vld [vmem:[#allocation2 + $0x18] sm:$0xff]
  %v40 = vld [vmem:[#allocation2 + $0x20] sm:$0xff]
  %v41 = vld [vmem:[#allocation2 + $0x28] sm:$0xff]
  %v42 = vld [vmem:[#allocation2 + $0x30] sm:$0xff]
  %v43 = vld [vmem:[#allocation2 + $0x38] sm:$0xff]
  %v44 = vld [vmem:[#allocation2 + $0x40] sm:$0xff]
  %v45 = vld [vmem:[#allocation2 + $0x48] sm:$0xff]
  %v46 = vld [vmem:[#allocation2 + $0x50] sm:$0xff]
  %v47 = vld [vmem:[#allocation2 + $0x58] sm:$0xff]
  %v48 = vld [vmem:[#allocation2 + $0x60] sm:$0xff]
  %v49 = vld [vmem:[#allocation2 + $0x68] sm:$0xff]
  %v50 = vld [vmem:[#allocation2 + $0x70] sm:$0xff]
  %v51 = vld [vmem:[#allocation2 + $0x78] sm:$0xff]
  %v52 = vld [vmem:[%s0] sm:$0xf]
  %v53 = vld [vmem:[%s0 + $0x4] sm:$0xf]
  %v54 = vld [vmem:[%s0 + $0x8] sm:$0xf]
  %v55 = vld [vmem:[%s0 + $0xc] sm:$0xf]
  %v56 = vld [vmem:[%s0 + $0x10] sm:$0xf]
  %v57 = vld [vmem:[%s0 + $0x14] sm:$0xf]
  %v58 = vld [vmem:[%s0 + $0x18] sm:$0xf]
  %v59 = vld [vmem:[%s0 + $0x1c] sm:$0xf]
  %v60 = vld [vmem:[%s0 + $0x20] sm:$0xf]
  %v61 = vld [vmem:[%s0 + $0x24] sm:$0xf]
  %v62 = vld [vmem:[%s0 + $0x28] sm:$0xf]
  %v63 = vld [vmem:[%s0 + $0x2c] sm:$0xf]
  %v64 = vld [vmem:[%s0 + $0x30] sm:$0xf]
  %v65 = vld [vmem:[%s0 + $0x34] sm:$0xf]
  %v66 = vld [vmem:[%s0 + $0x38] sm:$0xf]
  %v67 = vld [vmem:[%s0 + $0x3c] sm:$0xf]
  %s68 = sshra.s32 %s35, 3
  %s69 = sand.u32 %s35, 7
  %s70 = smul.addr %s68, 4
  %s71 = scalar_lea.vmem %s1, %s70
  %v72 = vld [vmem:[%s71] sm:$0xf]
  %v73 = vld [vmem:[%s71 + $0x4] sm:$0xf]
  %v74 = vld [vmem:[%s71 + $0x8] sm:$0xf]
  %v75 = vld [vmem:[%s71 + $0xc] sm:$0xf]
  %v76 = vld [vmem:[%s71 + $0x10] sm:$0xf]
  %v77 = vld [vmem:[%s71 + $0x14] sm:$0xf]
  %v78 = vld [vmem:[%s71 + $0x18] sm:$0xf]
  %v79 = vld [vmem:[%s71 + $0x1c] sm:$0xf]
  %v80 = vld [vmem:[%s71 + $0x20] sm:$0xf]
  %v81 = vld [vmem:[%s71 + $0x24] sm:$0xf]
  %v82 = vld [vmem:[%s71 + $0x28] sm:$0xf]
  %v83 = vld [vmem:[%s71 + $0x2c] sm:$0xf]
  %v84 = vld [vmem:[%s71 + $0x30] sm:$0xf]
  %v85 = vld [vmem:[%s71 + $0x34] sm:$0xf]
  %v86 = vld [vmem:[%s71 + $0x38] sm:$0xf]
  %v87 = vld [vmem:[%s71 + $0x3c] sm:$0xf]
  %v104 = vunpack.c.l.b16 %v52
  %v105 = vunpack.c.l.b16 %v53
  %v106 = vunpack.c.l.b16 %v54
  %v107 = vunpack.c.l.b16 %v55
  %v108 = vunpack.c.l.b16 %v56
  %v109 = vunpack.c.l.b16 %v57
  %v110 = vunpack.c.l.b16 %v58
  %v111 = vunpack.c.l.b16 %v59
  %v112 = vunpack.c.l.b16 %v60
  %v113 = vunpack.c.l.b16 %v61
  %v114 = vunpack.c.l.b16 %v62
  %v115 = vunpack.c.l.b16 %v63
  %v116 = vunpack.c.l.b16 %v64
  %v117 = vunpack.c.l.b16 %v65
  %v118 = vunpack.c.l.b16 %v66
  %v119 = vunpack.c.l.b16 %v67
  %v120 = vpack.c.b16 %v105, %v104
  %v121 = vpack.c.b16 %v107, %v106
  %v122 = vpack.c.b16 %v109, %v108
  %v123 = vpack.c.b16 %v111, %v110
  %v124 = vpack.c.b16 %v113, %v112
  %v125 = vpack.c.b16 %v115, %v114
  %v126 = vpack.c.b16 %v117, %v116
  %v127 = vpack.c.b16 %v119, %v118
  %v152 = vunpack.c.l.b16 %v72
  %v153 = vunpack.c.l.b16 %v73
  %v154 = vunpack.c.l.b16 %v74
  %v155 = vunpack.c.l.b16 %v75
  %v156 = vunpack.c.l.b16 %v76
  %v157 = vunpack.c.l.b16 %v77
  %v158 = vunpack.c.l.b16 %v78
  %v159 = vunpack.c.l.b16 %v79
  %v160 = vunpack.c.l.b16 %v80
  %v161 = vunpack.c.l.b16 %v81
  %v162 = vunpack.c.l.b16 %v82
  %v163 = vunpack.c.l.b16 %v83
  %v164 = vunpack.c.l.b16 %v84
  %v165 = vunpack.c.l.b16 %v85
  %v166 = vunpack.c.l.b16 %v86
  %v167 = vunpack.c.l.b16 %v87
  %v168 = vpack.c.b16 %v153, %v152
  %v169 = vpack.c.b16 %v155, %v154
  %v170 = vpack.c.b16 %v157, %v156
  %v171 = vpack.c.b16 %v159, %v158
  %v172 = vpack.c.b16 %v161, %v160
  %v173 = vpack.c.b16 %v163, %v162
  %v174 = vpack.c.b16 %v165, %v164
  %v175 = vpack.c.b16 %v167, %v166
  %184 = vmatprep.subr.bf16.mxu0 0
  %185 = vmatpush1.bf16.msra.mxu0 %v175
  %186 = vmatprep.subr.bf16.mxu0 0
  %187 = vmatpush1.bf16.msra.mxu0 %v174
  %188 = vmatprep.subr.bf16.mxu0 0
  %189 = vmatpush1.bf16.msra.mxu0 %v173
  %190 = vmatprep.subr.bf16.mxu0 0
  %191 = vmatpush1.bf16.msra.mxu0 %v172
  %192 = vmatprep.subr.bf16.mxu0 0
  %193 = vmatpush1.bf16.msra.mxu0 %v171
  %194 = vmatprep.subr.bf16.mxu0 0
  %195 = vmatpush1.bf16.msra.mxu0 %v170
  %196 = vmatprep.subr.bf16.mxu0 0
  %197 = vmatpush1.bf16.msra.mxu0 %v169
  %198 = vmatprep.subr.bf16.mxu0 0
  %199 = vmatpush1.bf16.msra.mxu0 %v168
  %200 = vmatprep.subr.bf16.mxu0 0
  %201 = vmatpush2.bf16.msra.mxu0 0
  %202 = vmatprep.subr.bf16.mxu0 0
  %203 = vmatpush2.bf16.msra.mxu0 0
  %204 = vmatprep.subr.bf16.mxu0 0
  %205 = vmatpush2.bf16.msra.mxu0 0
  %206 = vmatprep.subr.bf16.mxu0 0
  %207 = vmatpush2.bf16.msra.mxu0 0
  %208 = vmatprep.subr.bf16.mxu0 0
  %209 = vmatpush2.bf16.msra.mxu0 0
  %210 = vmatprep.subr.bf16.mxu0 0
  %211 = vmatpush2.bf16.msra.mxu0 0
  %212 = vmatprep.subr.bf16.mxu0 0
  %213 = vmatpush2.bf16.msra.mxu0 0
  %214 = vmatprep.subr.bf16.mxu0 0
  %215 = vmatpush2.bf16.msra.mxu0 0
  %216 = vmatprep.mubr.bf16.mxu0 0
  %217 = vmatmul.mubr.bf16.gmra.mxu0 %v120
  %v218 = vpop.f32.mrf.mxu0
  %v219 = vadd.f32 0.0, %v218
  %v220 = vpop.f32.mrf.mxu0
  %v221 = vpop.f32.mrf.mxu0
  %v222 = vadd.f32 0.0, %v221
  %v223 = vpop.f32.mrf.mxu0
  %224 = vmatprep.mubr.bf16.mxu0 0
  %225 = vmatmul.mubr.bf16.gmra.mxu0 %v121
  %v226 = vpop.f32.mrf.mxu0
  %v227 = vadd.f32 0.0, %v226
  %v228 = vpop.f32.mrf.mxu0
  %v229 = vpop.f32.mrf.mxu0
  %v230 = vadd.f32 0.0, %v229
  %v231 = vpop.f32.mrf.mxu0
  %232 = vmatprep.mubr.bf16.mxu0 0
  %233 = vmatmul.mubr.bf16.gmra.mxu0 %v122
  %v234 = vpop.f32.mrf.mxu0
  %v235 = vadd.f32 0.0, %v234
  %v236 = vpop.f32.mrf.mxu0
  %v237 = vpop.f32.mrf.mxu0
  %v238 = vadd.f32 0.0, %v237
  %v239 = vpop.f32.mrf.mxu0
  %240 = vmatprep.mubr.bf16.mxu0 0
  %241 = vmatmul.mubr.bf16.gmra.mxu0 %v123
  %v242 = vpop.f32.mrf.mxu0
  %v243 = vadd.f32 0.0, %v242
  %v244 = vpop.f32.mrf.mxu0
  %v245 = vpop.f32.mrf.mxu0
  %v246 = vadd.f32 0.0, %v245
  %v247 = vpop.f32.mrf.mxu0
  %248 = vmatprep.mubr.bf16.mxu0 0
  %249 = vmatmul.mubr.bf16.gmra.mxu0 %v124
  %v250 = vpop.f32.mrf.mxu0
  %v251 = vadd.f32 0.0, %v250
  %v252 = vpop.f32.mrf.mxu0
  %v253 = vpop.f32.mrf.mxu0
  %v254 = vadd.f32 0.0, %v253
  %v255 = vpop.f32.mrf.mxu0
  %256 = vmatprep.mubr.bf16.mxu0 0
  %257 = vmatmul.mubr.bf16.gmra.mxu0 %v125
  %v258 = vpop.f32.mrf.mxu0
  %v259 = vadd.f32 0.0, %v258
  %v260 = vpop.f32.mrf.mxu0
  %v261 = vpop.f32.mrf.mxu0
  %v262 = vadd.f32 0.0, %v261
  %v263 = vpop.f32.mrf.mxu0
  %264 = vmatprep.mubr.bf16.mxu0 0
  %265 = vmatmul.mubr.bf16.gmra.mxu0 %v126
  %v266 = vpop.f32.mrf.mxu0
  %v267 = vadd.f32 0.0, %v266
  %v268 = vpop.f32.mrf.mxu0
  %v269 = vpop.f32.mrf.mxu0
  %v270 = vadd.f32 0.0, %v269
  %v271 = vpop.f32.mrf.mxu0
  %272 = vmatprep.mubr.bf16.mxu0 0
  %273 = vmatmul.mubr.bf16.gmra.mxu0 %v127
  %v274 = vpop.f32.mrf.mxu0
  %v275 = vadd.f32 0.0, %v274
  %v276 = vpop.f32.mrf.mxu0
  %v277 = vpop.f32.mrf.mxu0
  %v278 = vadd.f32 0.0, %v277
  %v279 = vpop.f32.mrf.mxu0
  %280 = vdwg.mxu0
  %v281 = vadd.f32 %v36, %v219
  %v282 = vadd.f32 %v37, %v222
  %v283 = vadd.f32 %v38, %v227
  %v284 = vadd.f32 %v39, %v230
  %v285 = vadd.f32 %v40, %v235
  %v286 = vadd.f32 %v41, %v238
  %v287 = vadd.f32 %v42, %v243
  %v288 = vadd.f32 %v43, %v246
  %v289 = vadd.f32 %v44, %v251
  %v290 = vadd.f32 %v45, %v254
  %v291 = vadd.f32 %v46, %v259
  %v292 = vadd.f32 %v47, %v262
  %v293 = vadd.f32 %v48, %v267
  %v294 = vadd.f32 %v49, %v270
  %v295 = vadd.f32 %v50, %v275
  %v296 = vadd.f32 %v51, %v278
  %297 = vst [vmem:[#allocation2] sm:$0xff] %v281
  %298 = vst [vmem:[#allocation2 + $0x8] sm:$0xff] %v282
  %299 = vst [vmem:[#allocation2 + $0x10] sm:$0xff] %v283
  %300 = vst [vmem:[#allocation2 + $0x18] sm:$0xff] %v284
  %301 = vst [vmem:[#allocation2 + $0x20] sm:$0xff] %v285
  %302 = vst [vmem:[#allocation2 + $0x28] sm:$0xff] %v286
  %303 = vst [vmem:[#allocation2 + $0x30] sm:$0xff] %v287
  %304 = vst [vmem:[#allocation2 + $0x38] sm:$0xff] %v288
  %305 = vst [vmem:[#allocation2 + $0x40] sm:$0xff] %v289
  %306 = vst [vmem:[#allocation2 + $0x48] sm:$0xff] %v290
  %307 = vst [vmem:[#allocation2 + $0x50] sm:$0xff] %v291
  %308 = vst [vmem:[#allocation2 + $0x58] sm:$0xff] %v292
  %309 = vst [vmem:[#allocation2 + $0x60] sm:$0xff] %v293
  %310 = vst [vmem:[#allocation2 + $0x68] sm:$0xff] %v294
  %311 = vst [vmem:[#allocation2 + $0x70] sm:$0xff] %v295
  %312 = vst [vmem:[#allocation2 + $0x78] sm:$0xff] %v296
  // Predicated region
  $region18: #{conv_unet_forward.31} parent=0 // pred_check
    %p313 = pneg %p15
  $region19: #{conv_unet_forward.31} parent=0 // pred_check_branch
    %315 = sbr.rel (%p313) target = $region21
  $region20: #{conv_unet_forward.31} parent=0 // pred_region
    %v316 = vld [vmem:[#allocation2] sm:$0xff]
    %v317 = vld [vmem:[#allocation2 + $0x8] sm:$0xff]
    %v318 = vld [vmem:[#allocation2 + $0x10] sm:$0xff]
    %v319 = vld [vmem:[#allocation2 + $0x18] sm:$0xff]
    %v320 = vld [vmem:[#allocation2 + $0x20] sm:$0xff]
    %v321 = vld [vmem:[#allocation2 + $0x28] sm:$0xff]
    %v322 = vld [vmem:[#allocation2 + $0x30] sm:$0xff]
    %v323 = vld [vmem:[#allocation2 + $0x38] sm:$0xff]
    %v324 = vld [vmem:[#allocation2 + $0x40] sm:$0xff]
    %v325 = vld [vmem:[#allocation2 + $0x48] sm:$0xff]
    %v326 = vld [vmem:[#allocation2 + $0x50] sm:$0xff]
    %v327 = vld [vmem:[#allocation2 + $0x58] sm:$0xff]
    %v328 = vld [vmem:[#allocation2 + $0x60] sm:$0xff]
    %v329 = vld [vmem:[#allocation2 + $0x68] sm:$0xff]
    %v330 = vld [vmem:[#allocation2 + $0x70] sm:$0xff]
    %v331 = vld [vmem:[#allocation2 + $0x78] sm:$0xff]
    %v332 = vld [vmem:[%s2] sm:$0x1]
    %v334 = vlaneseq
    %v335 = vshrl.u32 %v334, 7
    %v336 = vsub.s32 0, %v335
    %v337 = vrot.slane %v332, %v336
    %v339 = vadd.f32 %v316, %v337
    %v340 = vadd.f32 %v317, %v337
    %v341 = vadd.f32 %v318, %v337
    %v342 = vadd.f32 %v319, %v337
    %v343 = vadd.f32 %v320, %v337
    %v344 = vadd.f32 %v321, %v337
    %v345 = vadd.f32 %v322, %v337
    %v346 = vadd.f32 %v323, %v337
    %v347 = vadd.f32 %v324, %v337
    %v348 = vadd.f32 %v325, %v337
    %v349 = vadd.f32 %v326, %v337
    %v350 = vadd.f32 %v327, %v337
    %v351 = vadd.f32 %v328, %v337
    %v352 = vadd.f32 %v329, %v337
    %v353 = vadd.f32 %v330, %v337
    %v354 = vadd.f32 %v331, %v337
    %v355 = vsub.f32 0.0, %v339
    %v356 = vsub.f32 0.0, %v340
    %v357 = vsub.f32 0.0, %v341
    %v358 = vsub.f32 0.0, %v342
    %v359 = vsub.f32 0.0, %v343
    %v360 = vsub.f32 0.0, %v344
    %v361 = vsub.f32 0.0, %v345
    %v362 = vsub.f32 0.0, %v346
    %v363 = vsub.f32 0.0, %v347
    %v364 = vsub.f32 0.0, %v348
    %v365 = vsub.f32 0.0, %v349
    %v366 = vsub.f32 0.0, %v350
    %v367 = vsub.f32 0.0, %v351
    %v368 = vsub.f32 0.0, %v352
    %v369 = vsub.f32 0.0, %v353
    %v370 = vsub.f32 0.0, %v354
    %v371 = vmul.f32 %v355, 1.442695
    %v372 = vpow.pop %v371
    %v373 = vmul.f32 %v356, 1.442695
    %v374 = vpow.pop %v373
    %v375 = vmul.f32 %v357, 1.442695
    %v376 = vpow.pop %v375
    %v377 = vmul.f32 %v358, 1.442695
    %v378 = vpow.pop %v377
    %v379 = vmul.f32 %v359, 1.442695
    %v380 = vpow.pop %v379
    %v381 = vmul.f32 %v360, 1.442695
    %v382 = vpow.pop %v381
    %v383 = vmul.f32 %v361, 1.442695
    %v384 = vpow.pop %v383
    %v385 = vmul.f32 %v362, 1.442695
    %v386 = vpow.pop %v385
    %v387 = vmul.f32 %v363, 1.442695
    %v388 = vpow.pop %v387
    %v389 = vmul.f32 %v364, 1.442695
    %v390 = vpow.pop %v389
    %v391 = vmul.f32 %v365, 1.442695
    %v392 = vpow.pop %v391
    %v393 = vmul.f32 %v366, 1.442695
    %v394 = vpow.pop %v393
    %v395 = vmul.f32 %v367, 1.442695
    %v396 = vpow.pop %v395
    %v397 = vmul.f32 %v368, 1.442695
    %v398 = vpow.pop %v397
    %v399 = vmul.f32 %v369, 1.442695
    %v400 = vpow.pop %v399
    %v401 = vmul.f32 %v370, 1.442695
    %v402 = vpow.pop %v401
    %v403 = vadd.f32 %v372, 1.0
    %v404 = vadd.f32 %v374, 1.0
    %v405 = vadd.f32 %v376, 1.0
    %v406 = vadd.f32 %v378, 1.0
    %v407 = vadd.f32 %v380, 1.0
    %v408 = vadd.f32 %v382, 1.0
    %v409 = vadd.f32 %v384, 1.0
    %v410 = vadd.f32 %v386, 1.0
    %v411 = vadd.f32 %v388, 1.0
    %v412 = vadd.f32 %v390, 1.0
    %v413 = vadd.f32 %v392, 1.0
    %v414 = vadd.f32 %v394, 1.0
    %v415 = vadd.f32 %v396, 1.0
    %v416 = vadd.f32 %v398, 1.0
    %v417 = vadd.f32 %v400, 1.0
    %v418 = vadd.f32 %v402, 1.0
    %v419 = vrcp.pop %v403
    %v420 = vrcp.pop %v404
    %v421 = vrcp.pop %v405
    %v422 = vrcp.pop %v406
    %v423 = vrcp.pop %v407
    %v424 = vrcp.pop %v408
    %v425 = vrcp.pop %v409
    %v426 = vrcp.pop %v410
    %v427 = vrcp.pop %v411
    %v428 = vrcp.pop %v412
    %v429 = vrcp.pop %v413
    %v430 = vrcp.pop %v414
    %v431 = vrcp.pop %v415
    %v432 = vrcp.pop %v416
    %v433 = vrcp.pop %v417
    %v434 = vrcp.pop %v418
    %v435 = vmax.f32 %v419, 0.0
    %v436 = vmax.f32 %v420, 0.0
    %v437 = vmax.f32 %v421, 0.0
    %v438 = vmax.f32 %v422, 0.0
    %v439 = vmax.f32 %v423, 0.0
    %v440 = vmax.f32 %v424, 0.0
    %v441 = vmax.f32 %v425, 0.0
    %v442 = vmax.f32 %v426, 0.0
    %v443 = vmax.f32 %v427, 0.0
    %v444 = vmax.f32 %v428, 0.0
    %v445 = vmax.f32 %v429, 0.0
    %v446 = vmax.f32 %v430, 0.0
    %v447 = vmax.f32 %v431, 0.0
    %v448 = vmax.f32 %v432, 0.0
    %v449 = vmax.f32 %v433, 0.0
    %v450 = vmax.f32 %v434, 0.0
    %v451 = vmin.f32 %v435, 1.0
    %v452 = vmin.f32 %v436, 1.0
    %v453 = vmin.f32 %v437, 1.0
    %v454 = vmin.f32 %v438, 1.0
    %v455 = vmin.f32 %v439, 1.0
    %v456 = vmin.f32 %v440, 1.0
    %v457 = vmin.f32 %v441, 1.0
    %v458 = vmin.f32 %v442, 1.0
    %v459 = vmin.f32 %v443, 1.0
    %v460 = vmin.f32 %v444, 1.0
    %v461 = vmin.f32 %v445, 1.0
    %v462 = vmin.f32 %v446, 1.0
    %v463 = vmin.f32 %v447, 1.0
    %v464 = vmin.f32 %v448, 1.0
    %v465 = vmin.f32 %v449, 1.0
    %v466 = vmin.f32 %v450, 1.0
    %467 = vst [vmem:[%s3] sm:$0xff] %v451
    %468 = vst [vmem:[%s3 + $0x8] sm:$0xff] %v452
    %469 = vst [vmem:[%s3 + $0x10] sm:$0xff] %v453
    %470 = vst [vmem:[%s3 + $0x18] sm:$0xff] %v454
    %471 = vst [vmem:[%s3 + $0x20] sm:$0xff] %v455
    %472 = vst [vmem:[%s3 + $0x28] sm:$0xff] %v456
    %473 = vst [vmem:[%s3 + $0x30] sm:$0xff] %v457
    %474 = vst [vmem:[%s3 + $0x38] sm:$0xff] %v458
    %475 = vst [vmem:[%s3 + $0x40] sm:$0xff] %v459
    %476 = vst [vmem:[%s3 + $0x48] sm:$0xff] %v460
    %477 = vst [vmem:[%s3 + $0x50] sm:$0xff] %v461
    %478 = vst [vmem:[%s3 + $0x58] sm:$0xff] %v462
    %479 = vst [vmem:[%s3 + $0x60] sm:$0xff] %v463
    %480 = vst [vmem:[%s3 + $0x68] sm:$0xff] %v464
    %481 = vst [vmem:[%s3 + $0x70] sm:$0xff] %v465
    %482 = vst [vmem:[%s3 + $0x78] sm:$0xff] %v466
  $region21: #{conv_unet_forward.31} parent=0 // pred_fallthru
    _
  // Predicated region
  $region22: #{conv_unet_forward.31} parent=0 // pred_check
    _
  $region23: #{conv_unet_forward.31} parent=0 // pred_check_branch
    %484 = sbr.rel (0) target = $region25
  $region24: #{conv_unet_forward.31} parent=0 // pred_region
    _
  $region25: #{conv_unet_forward.31} parent=0 // pred_fallthru
    _
  // Predicated region
  $region26: #{conv_unet_forward.31} parent=0 // pred_check
    _
  $region27: #{conv_unet_forward.31} parent=0 // pred_check_branch
    %486 = sbr.rel (0) target = $region29
  $region28: #{conv_unet_forward.31} parent=0 // pred_region
    _
  $region29: #{conv_unet_forward.31} parent=0 // pred_fallthru
    _

</llo_original>
